<compile_context>
chip_gen: v7x
topology: tpu7x:2x2x1
jax: 0.10.0
libtpu: 0.0.40
codegen_flags: <defaults>
</compile_context>

<pallas_src>
import functools

import jax
import jax.numpy as jnp
from jax import lax
from jax.experimental import pallas as pl
from jax.experimental.pallas import tpu as pltpu


# ----------------------------------------------------------------------------
# Fused kernel: input projection + BiLSTM + decoder projection + greedy decode.
# Everything is kept 2-D (rows = t*B + b) so there are no in-kernel reshapes.
# ----------------------------------------------------------------------------
def fused_kernel(x_ref, mask_ref, wih_ref, whh_ref, bcat_ref,
                 w1l_ref, b1_ref, wlab_ref, w2_ref, b2_ref,
                 lstm_ref, logits_ref, *, T, B, H):
    H2 = 2 * H
    L = wlab_ref.shape[0]
    O = w2_ref.shape[1]
    f32 = jnp.float32
    bf16 = jnp.bfloat16

    # ---- Phase 1: hoisted bidirectional input projection (one MXU matmul).
    # x_ref row (t*B+b) = [x[t,b] | x[T-1-t,b]]; wih is block-diagonal with
    # gate columns interleaved [i_f,i_b,f_f,f_b,g_f,g_b,o_f,o_b].
    pre = jnp.dot(x_ref[...].astype(bf16), wih_ref[...],
                  preferred_element_type=f32) + bcat_ref[...]        # (T*B, 8H)

    whh = whh_ref[...]                                               # (2H,8H) bf16
    mask = mask_ref[...]                                             # (T*B, 2H)

    # ---- Phase 2: BiLSTM recurrence, both directions in one blockdiag matmul.
    h = jnp.zeros((B, H2), f32)          # [h_fwd | h_bwd]
    c = jnp.zeros((B, H2), f32)          # [c_fwd | c_bwd]
    fwd_rows = [None] * T
    bwd_rows = [None] * T
    # TODO(synk): switch to lax.fori_loop with chunked output accumulation if T
    # grows large (full unroll is fine at toy sizes, vreg pressure is tiny).
    for s in range(T):
        gates = pre[s * B:(s + 1) * B, :] + jnp.dot(
            h.astype(bf16), whh, preferred_element_type=f32)         # (B, 8H)
        sg = jax.nn.sigmoid(gates)       # whole-vreg EUP pass, slice afterwards
        tg = jnp.tanh(gates)
        i_g = sg[:, 0 * H2:1 * H2]       # [i_f | i_b]
        f_g = sg[:, 1 * H2:2 * H2]       # [f_f | f_b]
        g_g = tg[:, 2 * H2:3 * H2]       # [g_f | g_b]
        o_g = sg[:, 3 * H2:4 * H2]       # [o_f | o_b]
        c_new = f_g * c + i_g * g_g
        h_new = o_g * jnp.tanh(c_new)
        m = mask[s * B:(s + 1) * B, :]   # fwd half = mask[s], bwd half = mask[T-1-s]
        h = jnp.where(m > 0.0, h_new, h)     # packed-seq: pads keep state
        c = jnp.where(m > 0.0, c_new, c)
        hm = h * m                           # pad_packed_sequence: zeros at pads
        fwd_rows[s] = hm[:, 0:H]             # forward h at time s
        bwd_rows[T - 1 - s] = hm[:, H:H2]    # backward h at time T-1-s

    lstm2d = jnp.concatenate(
        [jnp.concatenate(fwd_rows, axis=0), jnp.concatenate(bwd_rows, axis=0)],
        axis=-1)                                                     # (T*B, 2H)
    lstm_ref[...] = lstm2d               # single wide store, off the serial path

    # ---- Phase 3: hoisted decoder projection of the lstm part (one matmul).
    u = jnp.dot(lstm2d.astype(bf16), w1l_ref[...],
                preferred_element_type=f32) + b1_ref[...]            # (T*B, HID)

    wlab = wlab_ref[...]                                             # (L, HID) bf16
    w2 = w2_ref[...]                                                 # (HID, O) bf16
    b2 = b2_ref[...]                                                 # (1, O)
    cls_iota = lax.broadcasted_iota(jnp.int32, (B, O), 1)            # hoisted
    lab_iota = lax.broadcasted_iota(jnp.int32, (B, L), 1)            # hoisted

    # ---- Phase 4: greedy decoder; only argmax -> one-hot feedback is serial.
    # Softmax / predicted ids / one-hot OUTPUTS are recomputed in the wrapper.
    v = jnp.zeros((B, L), bf16)          # one-hot feedback (exact in bf16)
    logit_rows = [None] * T
    for t in range(T):
        h1 = jnp.tanh(u[t * B:(t + 1) * B, :] +
                      jnp.dot(v, wlab, preferred_element_type=f32))  # (B, HID)
        logit = jnp.dot(h1.astype(bf16), w2, preferred_element_type=f32) + b2
        logit_rows[t] = logit
        mx = jnp.max(logit, axis=1, keepdims=True)
        pred = jnp.min(jnp.where(logit == mx, cls_iota, O),
                       axis=1, keepdims=True)                        # first argmax
        v = (lab_iota == pred).astype(bf16)
    logits_ref[...] = jnp.concatenate(logit_rows, axis=0)            # single store


def _full_spec(shape):
    return pl.BlockSpec(shape, lambda i: (0,) * len(shape))


def fused_ac_seg(x_cat, mask_cat, kp, *, T, B, E, H, HID, L, O):
    TB = T * B
    out_shapes = (
        jax.ShapeDtypeStruct((TB, 2 * H), jnp.float32),   # lstm features
        jax.ShapeDtypeStruct((TB, O), jnp.float32),       # decoder logits
    )
    return pl.pallas_call(
        functools.partial(fused_kernel, T=T, B=B, H=H),
        out_shape=out_shapes,
        grid_spec=pltpu.PrefetchScalarGridSpec(
            num_scalar_prefetch=0,
            grid=(1,),
            in_specs=[
                _full_spec((TB, 2 * E)),        # x_cat
                _full_spec((TB, 2 * H)),        # mask_cat
                _full_spec((2 * E, 8 * H)),     # W_ih blockdiag (bf16)
                _full_spec((2 * H, 8 * H)),     # W_hh blockdiag (bf16)
                _full_spec((1, 8 * H)),         # lstm bias (f32)
                _full_spec((2 * H, HID)),       # W1 (lstm rows, bf16)
                _full_spec((1, HID)),           # b1
                _full_spec((L, HID)),           # W1 (label rows, bf16)
                _full_spec((HID, O)),           # W2 (bf16)
                _full_spec((1, O)),             # b2
            ],
            out_specs=[_full_spec((TB, 2 * H)), _full_spec((TB, O))],
        ),
        compiler_params=pltpu.CompilerParams(
            dimension_semantics=("arbitrary",)),
    )(x_cat, mask_cat, kp["wih_cat"], kp["whh_cat"], kp["b_cat"],
      kp["w1_lstm"], kp["b1"], kp["w1_lab"], kp["w2"], kp["b2"])


# ----------------------------------------------------------------------------
# One-time parameter rearrangement (outside the jitted forward): block-diagonal
# bidirectional weights with per-gate [fwd|bwd] interleaved columns, bf16 MXU
# operands, f32 biases.  b_lstm must already be b_ih + b_hh per direction.
# ----------------------------------------------------------------------------
def prepare_params(params):
    H = params["w_hh"].shape[1]
    wih_f, wih_b = params["w_ih"][0], params["w_ih"][1]    # (E, 4H) each
    whh_f, whh_b = params["w_hh"][0], params["w_hh"][1]    # (H, 4H)
    b_f, b_b = params["b_lstm"][0], params["b_lstm"][1]    # (4H,)

    def blockdiag(wf, wb):
        r = wf.shape[0]
        z = jnp.zeros((r, H), wf.dtype)
        cols = []
        for g in range(4):     # torch gate order i, f, g, o
            cols.append(jnp.concatenate([wf[:, g * H:(g + 1) * H], z], axis=0))
            cols.append(jnp.concatenate([z, wb[:, g * H:(g + 1) * H]], axis=0))
        return jnp.concatenate(cols, axis=1)               # (2R, 8H)

    def bias_cat(bf, bb):
        segs = []
        for g in range(4):
            segs += [bf[g * H:(g + 1) * H], bb[g * H:(g + 1) * H]]
        return jnp.concatenate(segs)[None, :]              # (1, 8H)

    bf16 = jnp.bfloat16
    return dict(
        wih_cat=blockdiag(wih_f, wih_b).astype(bf16),
        whh_cat=blockdiag(whh_f, whh_b).astype(bf16),
        b_cat=bias_cat(b_f, b_b).astype(jnp.float32),
        w1_lstm=params["w1_lstm"].astype(bf16),
        b1=params["b1"].astype(jnp.float32),
        w1_lab=params["w1_lab"].astype(bf16),
        w2=params["w2"].astype(bf16),
        b2=params["b2"].astype(jnp.float32),
    )


# ----------------------------------------------------------------------------
# Full forward.  Wrapper does only cheap layout plumbing on the tiny
# inputs/outputs; all matmuls / recurrences run inside the single kernel.
# ----------------------------------------------------------------------------
def ac_seg_forward(kparams, batch_embedded, mask):
    B, T, E = batch_embedded.shape
    H2 = kparams["whh_cat"].shape[0]
    H = H2 // 2
    HID = kparams["w1_lstm"].shape[1]
    L = kparams["w1_lab"].shape[0]
    O = kparams["w2"].shape[1]
    # one-hot feedback requires predicted ids to fit the label embedding
    # (the module uses ner_output_size == label_embedding_size)
    assert O <= L

    # Input layout for the fused bidirectional projection:
    #   row (t*B+b) = [x[t,b] | x[T-1-t,b]]   (fwd input | bwd input)
    x_tbe = jnp.transpose(batch_embedded, (1, 0, 2))                 # (T, B, E)
    x_cat = jnp.concatenate([x_tbe, x_tbe[::-1]], axis=-1).reshape(T * B, 2 * E)

    mask_tb = jnp.transpose(mask, (1, 0)).astype(jnp.float32)        # (T, B)
    m_f = jnp.broadcast_to(mask_tb[:, :, None], (T, B, H))
    m_b = jnp.broadcast_to(mask_tb[::-1, :, None], (T, B, H))
    mask_cat = jnp.concatenate([m_f, m_b], axis=-1).reshape(T * B, 2 * H)

    lstm2d, logits2d = fused_ac_seg(
        x_cat, mask_cat, kparams, T=T, B=B, E=E, H=H, HID=HID, L=L, O=O)

    lstm_out = jnp.transpose(lstm2d.reshape(T, B, 2 * H), (1, 0, 2))   # (B,T,2H)
    logits = jnp.transpose(logits2d.reshape(T, B, O), (1, 0, 2))       # (B,T,O)

    # Cheap, non-serial post-processing recomputed in XLA (exact softmax; the
    # kernel's feedback argmax and this argmax use identical tie-breaking).
    prob_dis = jax.nn.softmax(logits, axis=-1)                         # (B,T,O)
    pred = jnp.argmax(logits, axis=-1)                                 # (B,T)
    label_id_pred = pred.astype(jnp.float32)
    label_id_pred_embs = jax.nn.one_hot(pred, L, dtype=jnp.float32)    # (B,T,L)

    # NOTE: as in the original module, decoder outputs at padded timesteps are
    # computed from zero lstm features; callers should mask them.
    # TODO(synk): on v7x, split the two LSTM directions across the two
    # TensorCores (core_map / parallel grid axis) once T/B grow beyond toy size.
    return logits, prob_dis, label_id_pred, label_id_pred_embs, lstm_out


if __name__ == "__main__":
    # module hyperparameters (ner_output_size == label_embedding_size so the
    # one-hot scatter in NELabelEmbedding is always in-bounds)
    B, T = 2, 8
    E = 32        # token_embedding_size
    H = 32        # h_size
    L = 16        # label_embedding_size
    HID = 32      # ner_hidden_size
    O = 16        # ner_output_size

    key = jax.random.PRNGKey(0)
    ks = jax.random.split(key, 9)

    batch_embedded = jax.random.normal(ks[0], (B, T, E), jnp.float32)
    lengths = jnp.array([T, T - 3], jnp.int32)
    mask = (jnp.arange(T)[None, :] < lengths[:, None]).astype(jnp.float32)  # (B,T)

    s = 0.1
    params = dict(
        w_ih=s * jax.random.normal(ks[1], (2, E, 4 * H), jnp.float32),
        w_hh=s * jax.random.normal(ks[2], (2, H, 4 * H), jnp.float32),
        b_lstm=s * jax.random.normal(ks[3], (2, 4 * H), jnp.float32),  # b_ih + b_hh
        w1_lstm=s * jax.random.normal(ks[4], (2 * H, HID), jnp.float32),
        w1_lab=s * jax.random.normal(ks[5], (L, HID), jnp.float32),
        b1=s * jax.random.normal(ks[6], (1, HID), jnp.float32),
        w2=s * jax.random.normal(ks[7], (HID, O), jnp.float32),
        b2=s * jax.random.normal(ks[8], (1, O), jnp.float32),
    )

    kparams = prepare_params(params)          # one-time layout/bf16 prep
    fwd = jax.jit(ac_seg_forward)
    outs = fwd(kparams, batch_embedded, mask)
    jax.block_until_ready(outs)

    logits, prob_dis, label_id_pred, label_id_pred_embs, lstm_out = outs
    assert logits.shape == (B, T, O)
    assert prob_dis.shape == (B, T, O)
    assert label_id_pred.shape == (B, T)
    assert label_id_pred_embs.shape == (B, T, L)
    assert lstm_out.shape == (B, T, 2 * H)
    assert bool(jnp.all(jnp.isfinite(logits)))
    assert bool(jnp.all(jnp.isfinite(lstm_out)))
    # packed-sequence semantics: lstm features at padded steps are exactly zero
    assert bool(jnp.all(lstm_out[1, T - 3:, :] == 0.0))
    print("KERNEL_OK")
</pallas_src>

<mosaic_0001>
module attributes {stable_mosaic.version = 11 : i64} {
  func.func @fused_kernel(%arg0: i32, %arg1: memref<16x64xf32, #tpu.memory_space<vmem>>, %arg2: memref<16x64xf32, #tpu.memory_space<vmem>>, %arg3: memref<64x256xbf16, #tpu.memory_space<vmem>>, %arg4: memref<64x256xbf16, #tpu.memory_space<vmem>>, %arg5: memref<1x256xf32, #tpu.memory_space<vmem>>, %arg6: memref<64x32xbf16, #tpu.memory_space<vmem>>, %arg7: memref<1x32xf32, #tpu.memory_space<vmem>>, %arg8: memref<16x32xbf16, #tpu.memory_space<vmem>>, %arg9: memref<32x16xbf16, #tpu.memory_space<vmem>>, %arg10: memref<1x16xf32, #tpu.memory_space<vmem>>, %arg11: memref<16x64xf32, #tpu.memory_space<vmem>>, %arg12: memref<16x16xf32, #tpu.memory_space<vmem>>) attributes {dimension_semantics = [#tpu.dimension_semantics<arbitrary>], iteration_bounds = array<i64: 1>, scalar_prefetch = 0 : i64, scratch_operands = 0 : i64, tpu.core_type = #tpu.core_type<tc>, window_params = [{pipeline_mode = #tpu.pipeline_mode<synchronous>, transform_indices = @transform_0, window_bounds = array<i64: 16, 64>}, {pipeline_mode = #tpu.pipeline_mode<synchronous>, transform_indices = @transform_1, window_bounds = array<i64: 16, 64>}, {pipeline_mode = #tpu.pipeline_mode<synchronous>, transform_indices = @transform_2, window_bounds = array<i64: 64, 256>}, {pipeline_mode = #tpu.pipeline_mode<synchronous>, transform_indices = @transform_3, window_bounds = array<i64: 64, 256>}, {pipeline_mode = #tpu.pipeline_mode<synchronous>, transform_indices = @transform_4, window_bounds = array<i64: 1, 256>}, {pipeline_mode = #tpu.pipeline_mode<synchronous>, transform_indices = @transform_5, window_bounds = array<i64: 64, 32>}, {pipeline_mode = #tpu.pipeline_mode<synchronous>, transform_indices = @transform_6, window_bounds = array<i64: 1, 32>}, {pipeline_mode = #tpu.pipeline_mode<synchronous>, transform_indices = @transform_7, window_bounds = array<i64: 16, 32>}, {pipeline_mode = #tpu.pipeline_mode<synchronous>, transform_indices = @transform_8, window_bounds = array<i64: 32, 16>}, {pipeline_mode = #tpu.pipeline_mode<synchronous>, transform_indices = @transform_9, window_bounds = array<i64: 1, 16>}, {pipeline_mode = #tpu.pipeline_mode<synchronous>, transform_indices = @transform_10, window_bounds = array<i64: 16, 64>}, {pipeline_mode = #tpu.pipeline_mode<synchronous>, transform_indices = @transform_11, window_bounds = array<i64: 16, 16>}]} {
    %c0 = arith.constant 0 : index
    %c0_0 = arith.constant 0 : index
    %0 = vector.load %arg1[%c0, %c0_0] : memref<16x64xf32, #tpu.memory_space<vmem>>, vector<16x64xf32>
    %1 = arith.truncf %0 : vector<16x64xf32> to vector<16x64xbf16>
    %c0_1 = arith.constant 0 : index
    %c0_2 = arith.constant 0 : index
    %2 = vector.load %arg3[%c0_1, %c0_2] : memref<64x256xbf16, #tpu.memory_space<vmem>>, vector<64x256xbf16>
    %cst = arith.constant dense<0.000000e+00> : vector<16x256xf32>
    %3 = tpu.matmul %1, %2, %cst {dimension_numbers = #tpu.dot_dimension_numbers<[1], [0], [0], [1], [0, 0, 1, 1], [], []>} : vector<16x64xbf16>, vector<64x256xbf16>, vector<16x256xf32> -> vector<16x256xf32>
    %c0_3 = arith.constant 0 : index
    %c0_4 = arith.constant 0 : index
    %4 = vector.load %arg5[%c0_3, %c0_4] : memref<1x256xf32, #tpu.memory_space<vmem>>, vector<1x256xf32>
    %5 = vector.broadcast %4 : vector<1x256xf32> to vector<16x256xf32>
    %6 = arith.addf %3, %5 : vector<16x256xf32>
    %c0_5 = arith.constant 0 : index
    %c0_6 = arith.constant 0 : index
    %7 = vector.load %arg4[%c0_5, %c0_6] : memref<64x256xbf16, #tpu.memory_space<vmem>>, vector<64x256xbf16>
    %c0_7 = arith.constant 0 : index
    %c0_8 = arith.constant 0 : index
    %8 = vector.load %arg2[%c0_7, %c0_8] : memref<16x64xf32, #tpu.memory_space<vmem>>, vector<16x64xf32>
    %cst_9 = arith.constant 0.000000e+00 : f32
    %9 = vector.broadcast %cst_9 : f32 to vector<2x64xf32>
    %cst_10 = arith.constant 0.000000e+00 : f32
    %10 = vector.broadcast %cst_10 : f32 to vector<2x64xf32>
    %11 = vector.extract_strided_slice %6 {offsets = [0, 0], sizes = [2, 256], strides = [1, 1]} : vector<16x256xf32> to vector<2x256xf32>
    %12 = arith.truncf %9 : vector<2x64xf32> to vector<2x64xbf16>
    %cst_11 = arith.constant dense<0.000000e+00> : vector<2x256xf32>
    %13 = tpu.matmul %12, %7, %cst_11 {dimension_numbers = #tpu.dot_dimension_numbers<[1], [0], [0], [1], [0, 0, 1, 1], [], []>} : vector<2x64xbf16>, vector<64x256xbf16>, vector<2x256xf32> -> vector<2x256xf32>
    %14 = arith.addf %11, %13 : vector<2x256xf32>
    %15 = arith.negf %14 : vector<2x256xf32>
    %16 = math.exp %15 : vector<2x256xf32>
    %cst_12 = arith.constant 1.000000e+00 : f32
    %17 = vector.broadcast %cst_12 : f32 to vector<2x256xf32>
    %18 = arith.addf %17, %16 : vector<2x256xf32>
    %19 = arith.divf %17, %18 : vector<2x256xf32>
    %20 = math.tanh %14 : vector<2x256xf32>
    %21 = vector.extract_strided_slice %19 {offsets = [0, 0], sizes = [2, 64], strides = [1, 1]} : vector<2x256xf32> to vector<2x64xf32>
    %22 = vector.extract_strided_slice %19 {offsets = [0, 64], sizes = [2, 64], strides = [1, 1]} : vector<2x256xf32> to vector<2x64xf32>
    %23 = vector.extract_strided_slice %20 {offsets = [0, 128], sizes = [2, 64], strides = [1, 1]} : vector<2x256xf32> to vector<2x64xf32>
    %24 = vector.extract_strided_slice %19 {offsets = [0, 192], sizes = [2, 64], strides = [1, 1]} : vector<2x256xf32> to vector<2x64xf32>
    %25 = arith.mulf %22, %10 : vector<2x64xf32>
    %26 = arith.mulf %21, %23 : vector<2x64xf32>
    %27 = arith.addf %25, %26 : vector<2x64xf32>
    %28 = math.tanh %27 : vector<2x64xf32>
    %29 = arith.mulf %24, %28 : vector<2x64xf32>
    %30 = vector.extract_strided_slice %8 {offsets = [0, 0], sizes = [2, 64], strides = [1, 1]} : vector<16x64xf32> to vector<2x64xf32>
    %cst_13 = arith.constant 0.000000e+00 : f32
    %31 = vector.broadcast %cst_13 : f32 to vector<2x64xf32>
    %32 = arith.cmpf ogt, %30, %31 : vector<2x64xf32>
    %33 = arith.select %32, %29, %9 : vector<2x64xi1>, vector<2x64xf32>
    %cst_14 = arith.constant 0.000000e+00 : f32
    %34 = vector.broadcast %cst_14 : f32 to vector<2x64xf32>
    %35 = arith.cmpf ogt, %30, %34 : vector<2x64xf32>
    %36 = arith.select %35, %27, %10 : vector<2x64xi1>, vector<2x64xf32>
    %37 = arith.mulf %33, %30 : vector<2x64xf32>
    %38 = vector.extract_strided_slice %37 {offsets = [0, 0], sizes = [2, 32], strides = [1, 1]} : vector<2x64xf32> to vector<2x32xf32>
    %39 = vector.extract_strided_slice %37 {offsets = [0, 32], sizes = [2, 32], strides = [1, 1]} : vector<2x64xf32> to vector<2x32xf32>
    %40 = vector.extract_strided_slice %6 {offsets = [2, 0], sizes = [2, 256], strides = [1, 1]} : vector<16x256xf32> to vector<2x256xf32>
    %41 = arith.truncf %33 : vector<2x64xf32> to vector<2x64xbf16>
    %cst_15 = arith.constant dense<0.000000e+00> : vector<2x256xf32>
    %42 = tpu.matmul %41, %7, %cst_15 {dimension_numbers = #tpu.dot_dimension_numbers<[1], [0], [0], [1], [0, 0, 1, 1], [], []>} : vector<2x64xbf16>, vector<64x256xbf16>, vector<2x256xf32> -> vector<2x256xf32>
    %43 = arith.addf %40, %42 : vector<2x256xf32>
    %44 = arith.negf %43 : vector<2x256xf32>
    %45 = math.exp %44 : vector<2x256xf32>
    %cst_16 = arith.constant 1.000000e+00 : f32
    %46 = vector.broadcast %cst_16 : f32 to vector<2x256xf32>
    %47 = arith.addf %46, %45 : vector<2x256xf32>
    %48 = arith.divf %46, %47 : vector<2x256xf32>
    %49 = math.tanh %43 : vector<2x256xf32>
    %50 = vector.extract_strided_slice %48 {offsets = [0, 0], sizes = [2, 64], strides = [1, 1]} : vector<2x256xf32> to vector<2x64xf32>
    %51 = vector.extract_strided_slice %48 {offsets = [0, 64], sizes = [2, 64], strides = [1, 1]} : vector<2x256xf32> to vector<2x64xf32>
    %52 = vector.extract_strided_slice %49 {offsets = [0, 128], sizes = [2, 64], strides = [1, 1]} : vector<2x256xf32> to vector<2x64xf32>
    %53 = vector.extract_strided_slice %48 {offsets = [0, 192], sizes = [2, 64], strides = [1, 1]} : vector<2x256xf32> to vector<2x64xf32>
    %54 = arith.mulf %51, %36 : vector<2x64xf32>
    %55 = arith.mulf %50, %52 : vector<2x64xf32>
    %56 = arith.addf %54, %55 : vector<2x64xf32>
    %57 = math.tanh %56 : vector<2x64xf32>
    %58 = arith.mulf %53, %57 : vector<2x64xf32>
    %59 = vector.extract_strided_slice %8 {offsets = [2, 0], sizes = [2, 64], strides = [1, 1]} : vector<16x64xf32> to vector<2x64xf32>
    %cst_17 = arith.constant 0.000000e+00 : f32
    %60 = vector.broadcast %cst_17 : f32 to vector<2x64xf32>
    %61 = arith.cmpf ogt, %59, %60 : vector<2x64xf32>
    %62 = arith.select %61, %58, %33 : vector<2x64xi1>, vector<2x64xf32>
    %cst_18 = arith.constant 0.000000e+00 : f32
    %63 = vector.broadcast %cst_18 : f32 to vector<2x64xf32>
    %64 = arith.cmpf ogt, %59, %63 : vector<2x64xf32>
    %65 = arith.select %64, %56, %36 : vector<2x64xi1>, vector<2x64xf32>
    %66 = arith.mulf %62, %59 : vector<2x64xf32>
    %67 = vector.extract_strided_slice %66 {offsets = [0, 0], sizes = [2, 32], strides = [1, 1]} : vector<2x64xf32> to vector<2x32xf32>
    %68 = vector.extract_strided_slice %66 {offsets = [0, 32], sizes = [2, 32], strides = [1, 1]} : vector<2x64xf32> to vector<2x32xf32>
    %69 = vector.extract_strided_slice %6 {offsets = [4, 0], sizes = [2, 256], strides = [1, 1]} : vector<16x256xf32> to vector<2x256xf32>
    %70 = arith.truncf %62 : vector<2x64xf32> to vector<2x64xbf16>
    %cst_19 = arith.constant dense<0.000000e+00> : vector<2x256xf32>
    %71 = tpu.matmul %70, %7, %cst_19 {dimension_numbers = #tpu.dot_dimension_numbers<[1], [0], [0], [1], [0, 0, 1, 1], [], []>} : vector<2x64xbf16>, vector<64x256xbf16>, vector<2x256xf32> -> vector<2x256xf32>
    %72 = arith.addf %69, %71 : vector<2x256xf32>
    %73 = arith.negf %72 : vector<2x256xf32>
    %74 = math.exp %73 : vector<2x256xf32>
    %cst_20 = arith.constant 1.000000e+00 : f32
    %75 = vector.broadcast %cst_20 : f32 to vector<2x256xf32>
    %76 = arith.addf %75, %74 : vector<2x256xf32>
    %77 = arith.divf %75, %76 : vector<2x256xf32>
    %78 = math.tanh %72 : vector<2x256xf32>
    %79 = vector.extract_strided_slice %77 {offsets = [0, 0], sizes = [2, 64], strides = [1, 1]} : vector<2x256xf32> to vector<2x64xf32>
    %80 = vector.extract_strided_slice %77 {offsets = [0, 64], sizes = [2, 64], strides = [1, 1]} : vector<2x256xf32> to vector<2x64xf32>
    %81 = vector.extract_strided_slice %78 {offsets = [0, 128], sizes = [2, 64], strides = [1, 1]} : vector<2x256xf32> to vector<2x64xf32>
    %82 = vector.extract_strided_slice %77 {offsets = [0, 192], sizes = [2, 64], strides = [1, 1]} : vector<2x256xf32> to vector<2x64xf32>
    %83 = arith.mulf %80, %65 : vector<2x64xf32>
    %84 = arith.mulf %79, %81 : vector<2x64xf32>
    %85 = arith.addf %83, %84 : vector<2x64xf32>
    %86 = math.tanh %85 : vector<2x64xf32>
    %87 = arith.mulf %82, %86 : vector<2x64xf32>
    %88 = vector.extract_strided_slice %8 {offsets = [4, 0], sizes = [2, 64], strides = [1, 1]} : vector<16x64xf32> to vector<2x64xf32>
    %cst_21 = arith.constant 0.000000e+00 : f32
    %89 = vector.broadcast %cst_21 : f32 to vector<2x64xf32>
    %90 = arith.cmpf ogt, %88, %89 : vector<2x64xf32>
    %91 = arith.select %90, %87, %62 : vector<2x64xi1>, vector<2x64xf32>
    %cst_22 = arith.constant 0.000000e+00 : f32
    %92 = vector.broadcast %cst_22 : f32 to vector<2x64xf32>
    %93 = arith.cmpf ogt, %88, %92 : vector<2x64xf32>
    %94 = arith.select %93, %85, %65 : vector<2x64xi1>, vector<2x64xf32>
    %95 = arith.mulf %91, %88 : vector<2x64xf32>
    %96 = vector.extract_strided_slice %95 {offsets = [0, 0], sizes = [2, 32], strides = [1, 1]} : vector<2x64xf32> to vector<2x32xf32>
    %97 = vector.extract_strided_slice %95 {offsets = [0, 32], sizes = [2, 32], strides = [1, 1]} : vector<2x64xf32> to vector<2x32xf32>
    %98 = vector.extract_strided_slice %6 {offsets = [6, 0], sizes = [2, 256], strides = [1, 1]} : vector<16x256xf32> to vector<2x256xf32>
    %99 = arith.truncf %91 : vector<2x64xf32> to vector<2x64xbf16>
    %cst_23 = arith.constant dense<0.000000e+00> : vector<2x256xf32>
    %100 = tpu.matmul %99, %7, %cst_23 {dimension_numbers = #tpu.dot_dimension_numbers<[1], [0], [0], [1], [0, 0, 1, 1], [], []>} : vector<2x64xbf16>, vector<64x256xbf16>, vector<2x256xf32> -> vector<2x256xf32>
    %101 = arith.addf %98, %100 : vector<2x256xf32>
    %102 = arith.negf %101 : vector<2x256xf32>
    %103 = math.exp %102 : vector<2x256xf32>
    %cst_24 = arith.constant 1.000000e+00 : f32
    %104 = vector.broadcast %cst_24 : f32 to vector<2x256xf32>
    %105 = arith.addf %104, %103 : vector<2x256xf32>
    %106 = arith.divf %104, %105 : vector<2x256xf32>
    %107 = math.tanh %101 : vector<2x256xf32>
    %108 = vector.extract_strided_slice %106 {offsets = [0, 0], sizes = [2, 64], strides = [1, 1]} : vector<2x256xf32> to vector<2x64xf32>
    %109 = vector.extract_strided_slice %106 {offsets = [0, 64], sizes = [2, 64], strides = [1, 1]} : vector<2x256xf32> to vector<2x64xf32>
    %110 = vector.extract_strided_slice %107 {offsets = [0, 128], sizes = [2, 64], strides = [1, 1]} : vector<2x256xf32> to vector<2x64xf32>
    %111 = vector.extract_strided_slice %106 {offsets = [0, 192], sizes = [2, 64], strides = [1, 1]} : vector<2x256xf32> to vector<2x64xf32>
    %112 = arith.mulf %109, %94 : vector<2x64xf32>
    %113 = arith.mulf %108, %110 : vector<2x64xf32>
    %114 = arith.addf %112, %113 : vector<2x64xf32>
    %115 = math.tanh %114 : vector<2x64xf32>
    %116 = arith.mulf %111, %115 : vector<2x64xf32>
    %117 = vector.extract_strided_slice %8 {offsets = [6, 0], sizes = [2, 64], strides = [1, 1]} : vector<16x64xf32> to vector<2x64xf32>
    %cst_25 = arith.constant 0.000000e+00 : f32
    %118 = vector.broadcast %cst_25 : f32 to vector<2x64xf32>
    %119 = arith.cmpf ogt, %117, %118 : vector<2x64xf32>
    %120 = arith.select %119, %116, %91 : vector<2x64xi1>, vector<2x64xf32>
    %cst_26 = arith.constant 0.000000e+00 : f32
    %121 = vector.broadcast %cst_26 : f32 to vector<2x64xf32>
    %122 = arith.cmpf ogt, %117, %121 : vector<2x64xf32>
    %123 = arith.select %122, %114, %94 : vector<2x64xi1>, vector<2x64xf32>
    %124 = arith.mulf %120, %117 : vector<2x64xf32>
    %125 = vector.extract_strided_slice %124 {offsets = [0, 0], sizes = [2, 32], strides = [1, 1]} : vector<2x64xf32> to vector<2x32xf32>
    %126 = vector.extract_strided_slice %124 {offsets = [0, 32], sizes = [2, 32], strides = [1, 1]} : vector<2x64xf32> to vector<2x32xf32>
    %127 = vector.extract_strided_slice %6 {offsets = [8, 0], sizes = [2, 256], strides = [1, 1]} : vector<16x256xf32> to vector<2x256xf32>
    %128 = arith.truncf %120 : vector<2x64xf32> to vector<2x64xbf16>
    %cst_27 = arith.constant dense<0.000000e+00> : vector<2x256xf32>
    %129 = tpu.matmul %128, %7, %cst_27 {dimension_numbers = #tpu.dot_dimension_numbers<[1], [0], [0], [1], [0, 0, 1, 1], [], []>} : vector<2x64xbf16>, vector<64x256xbf16>, vector<2x256xf32> -> vector<2x256xf32>
    %130 = arith.addf %127, %129 : vector<2x256xf32>
    %131 = arith.negf %130 : vector<2x256xf32>
    %132 = math.exp %131 : vector<2x256xf32>
    %cst_28 = arith.constant 1.000000e+00 : f32
    %133 = vector.broadcast %cst_28 : f32 to vector<2x256xf32>
    %134 = arith.addf %133, %132 : vector<2x256xf32>
    %135 = arith.divf %133, %134 : vector<2x256xf32>
    %136 = math.tanh %130 : vector<2x256xf32>
    %137 = vector.extract_strided_slice %135 {offsets = [0, 0], sizes = [2, 64], strides = [1, 1]} : vector<2x256xf32> to vector<2x64xf32>
    %138 = vector.extract_strided_slice %135 {offsets = [0, 64], sizes = [2, 64], strides = [1, 1]} : vector<2x256xf32> to vector<2x64xf32>
    %139 = vector.extract_strided_slice %136 {offsets = [0, 128], sizes = [2, 64], strides = [1, 1]} : vector<2x256xf32> to vector<2x64xf32>
    %140 = vector.extract_strided_slice %135 {offsets = [0, 192], sizes = [2, 64], strides = [1, 1]} : vector<2x256xf32> to vector<2x64xf32>
    %141 = arith.mulf %138, %123 : vector<2x64xf32>
    %142 = arith.mulf %137, %139 : vector<2x64xf32>
    %143 = arith.addf %141, %142 : vector<2x64xf32>
    %144 = math.tanh %143 : vector<2x64xf32>
    %145 = arith.mulf %140, %144 : vector<2x64xf32>
    %146 = vector.extract_strided_slice %8 {offsets = [8, 0], sizes = [2, 64], strides = [1, 1]} : vector<16x64xf32> to vector<2x64xf32>
    %cst_29 = arith.constant 0.000000e+00 : f32
    %147 = vector.broadcast %cst_29 : f32 to vector<2x64xf32>
    %148 = arith.cmpf ogt, %146, %147 : vector<2x64xf32>
    %149 = arith.select %148, %145, %120 : vector<2x64xi1>, vector<2x64xf32>
    %cst_30 = arith.constant 0.000000e+00 : f32
    %150 = vector.broadcast %cst_30 : f32 to vector<2x64xf32>
    %151 = arith.cmpf ogt, %146, %150 : vector<2x64xf32>
    %152 = arith.select %151, %143, %123 : vector<2x64xi1>, vector<2x64xf32>
    %153 = arith.mulf %149, %146 : vector<2x64xf32>
    %154 = vector.extract_strided_slice %153 {offsets = [0, 0], sizes = [2, 32], strides = [1, 1]} : vector<2x64xf32> to vector<2x32xf32>
    %155 = vector.extract_strided_slice %153 {offsets = [0, 32], sizes = [2, 32], strides = [1, 1]} : vector<2x64xf32> to vector<2x32xf32>
    %156 = vector.extract_strided_slice %6 {offsets = [10, 0], sizes = [2, 256], strides = [1, 1]} : vector<16x256xf32> to vector<2x256xf32>
    %157 = arith.truncf %149 : vector<2x64xf32> to vector<2x64xbf16>
    %cst_31 = arith.constant dense<0.000000e+00> : vector<2x256xf32>
    %158 = tpu.matmul %157, %7, %cst_31 {dimension_numbers = #tpu.dot_dimension_numbers<[1], [0], [0], [1], [0, 0, 1, 1], [], []>} : vector<2x64xbf16>, vector<64x256xbf16>, vector<2x256xf32> -> vector<2x256xf32>
    %159 = arith.addf %156, %158 : vector<2x256xf32>
    %160 = arith.negf %159 : vector<2x256xf32>
    %161 = math.exp %160 : vector<2x256xf32>
    %cst_32 = arith.constant 1.000000e+00 : f32
    %162 = vector.broadcast %cst_32 : f32 to vector<2x256xf32>
    %163 = arith.addf %162, %161 : vector<2x256xf32>
    %164 = arith.divf %162, %163 : vector<2x256xf32>
    %165 = math.tanh %159 : vector<2x256xf32>
    %166 = vector.extract_strided_slice %164 {offsets = [0, 0], sizes = [2, 64], strides = [1, 1]} : vector<2x256xf32> to vector<2x64xf32>
    %167 = vector.extract_strided_slice %164 {offsets = [0, 64], sizes = [2, 64], strides = [1, 1]} : vector<2x256xf32> to vector<2x64xf32>
    %168 = vector.extract_strided_slice %165 {offsets = [0, 128], sizes = [2, 64], strides = [1, 1]} : vector<2x256xf32> to vector<2x64xf32>
    %169 = vector.extract_strided_slice %164 {offsets = [0, 192], sizes = [2, 64], strides = [1, 1]} : vector<2x256xf32> to vector<2x64xf32>
    %170 = arith.mulf %167, %152 : vector<2x64xf32>
    %171 = arith.mulf %166, %168 : vector<2x64xf32>
    %172 = arith.addf %170, %171 : vector<2x64xf32>
    %173 = math.tanh %172 : vector<2x64xf32>
    %174 = arith.mulf %169, %173 : vector<2x64xf32>
    %175 = vector.extract_strided_slice %8 {offsets = [10, 0], sizes = [2, 64], strides = [1, 1]} : vector<16x64xf32> to vector<2x64xf32>
    %cst_33 = arith.constant 0.000000e+00 : f32
    %176 = vector.broadcast %cst_33 : f32 to vector<2x64xf32>
    %177 = arith.cmpf ogt, %175, %176 : vector<2x64xf32>
    %178 = arith.select %177, %174, %149 : vector<2x64xi1>, vector<2x64xf32>
    %cst_34 = arith.constant 0.000000e+00 : f32
    %179 = vector.broadcast %cst_34 : f32 to vector<2x64xf32>
    %180 = arith.cmpf ogt, %175, %179 : vector<2x64xf32>
    %181 = arith.select %180, %172, %152 : vector<2x64xi1>, vector<2x64xf32>
    %182 = arith.mulf %178, %175 : vector<2x64xf32>
    %183 = vector.extract_strided_slice %182 {offsets = [0, 0], sizes = [2, 32], strides = [1, 1]} : vector<2x64xf32> to vector<2x32xf32>
    %184 = vector.extract_strided_slice %182 {offsets = [0, 32], sizes = [2, 32], strides = [1, 1]} : vector<2x64xf32> to vector<2x32xf32>
    %185 = vector.extract_strided_slice %6 {offsets = [12, 0], sizes = [2, 256], strides = [1, 1]} : vector<16x256xf32> to vector<2x256xf32>
    %186 = arith.truncf %178 : vector<2x64xf32> to vector<2x64xbf16>
    %cst_35 = arith.constant dense<0.000000e+00> : vector<2x256xf32>
    %187 = tpu.matmul %186, %7, %cst_35 {dimension_numbers = #tpu.dot_dimension_numbers<[1], [0], [0], [1], [0, 0, 1, 1], [], []>} : vector<2x64xbf16>, vector<64x256xbf16>, vector<2x256xf32> -> vector<2x256xf32>
    %188 = arith.addf %185, %187 : vector<2x256xf32>
    %189 = arith.negf %188 : vector<2x256xf32>
    %190 = math.exp %189 : vector<2x256xf32>
    %cst_36 = arith.constant 1.000000e+00 : f32
    %191 = vector.broadcast %cst_36 : f32 to vector<2x256xf32>
    %192 = arith.addf %191, %190 : vector<2x256xf32>
    %193 = arith.divf %191, %192 : vector<2x256xf32>
    %194 = math.tanh %188 : vector<2x256xf32>
    %195 = vector.extract_strided_slice %193 {offsets = [0, 0], sizes = [2, 64], strides = [1, 1]} : vector<2x256xf32> to vector<2x64xf32>
    %196 = vector.extract_strided_slice %193 {offsets = [0, 64], sizes = [2, 64], strides = [1, 1]} : vector<2x256xf32> to vector<2x64xf32>
    %197 = vector.extract_strided_slice %194 {offsets = [0, 128], sizes = [2, 64], strides = [1, 1]} : vector<2x256xf32> to vector<2x64xf32>
    %198 = vector.extract_strided_slice %193 {offsets = [0, 192], sizes = [2, 64], strides = [1, 1]} : vector<2x256xf32> to vector<2x64xf32>
    %199 = arith.mulf %196, %181 : vector<2x64xf32>
    %200 = arith.mulf %195, %197 : vector<2x64xf32>
    %201 = arith.addf %199, %200 : vector<2x64xf32>
    %202 = math.tanh %201 : vector<2x64xf32>
    %203 = arith.mulf %198, %202 : vector<2x64xf32>
    %204 = vector.extract_strided_slice %8 {offsets = [12, 0], sizes = [2, 64], strides = [1, 1]} : vector<16x64xf32> to vector<2x64xf32>
    %cst_37 = arith.constant 0.000000e+00 : f32
    %205 = vector.broadcast %cst_37 : f32 to vector<2x64xf32>
    %206 = arith.cmpf ogt, %204, %205 : vector<2x64xf32>
    %207 = arith.select %206, %203, %178 : vector<2x64xi1>, vector<2x64xf32>
    %cst_38 = arith.constant 0.000000e+00 : f32
    %208 = vector.broadcast %cst_38 : f32 to vector<2x64xf32>
    %209 = arith.cmpf ogt, %204, %208 : vector<2x64xf32>
    %210 = arith.select %209, %201, %181 : vector<2x64xi1>, vector<2x64xf32>
    %211 = arith.mulf %207, %204 : vector<2x64xf32>
    %212 = vector.extract_strided_slice %211 {offsets = [0, 0], sizes = [2, 32], strides = [1, 1]} : vector<2x64xf32> to vector<2x32xf32>
    %213 = vector.extract_strided_slice %211 {offsets = [0, 32], sizes = [2, 32], strides = [1, 1]} : vector<2x64xf32> to vector<2x32xf32>
    %214 = vector.extract_strided_slice %6 {offsets = [14, 0], sizes = [2, 256], strides = [1, 1]} : vector<16x256xf32> to vector<2x256xf32>
    %215 = arith.truncf %207 : vector<2x64xf32> to vector<2x64xbf16>
    %cst_39 = arith.constant dense<0.000000e+00> : vector<2x256xf32>
    %216 = tpu.matmul %215, %7, %cst_39 {dimension_numbers = #tpu.dot_dimension_numbers<[1], [0], [0], [1], [0, 0, 1, 1], [], []>} : vector<2x64xbf16>, vector<64x256xbf16>, vector<2x256xf32> -> vector<2x256xf32>
    %217 = arith.addf %214, %216 : vector<2x256xf32>
    %218 = arith.negf %217 : vector<2x256xf32>
    %219 = math.exp %218 : vector<2x256xf32>
    %cst_40 = arith.constant 1.000000e+00 : f32
    %220 = vector.broadcast %cst_40 : f32 to vector<2x256xf32>
    %221 = arith.addf %220, %219 : vector<2x256xf32>
    %222 = arith.divf %220, %221 : vector<2x256xf32>
    %223 = math.tanh %217 : vector<2x256xf32>
    %224 = vector.extract_strided_slice %222 {offsets = [0, 0], sizes = [2, 64], strides = [1, 1]} : vector<2x256xf32> to vector<2x64xf32>
    %225 = vector.extract_strided_slice %222 {offsets = [0, 64], sizes = [2, 64], strides = [1, 1]} : vector<2x256xf32> to vector<2x64xf32>
    %226 = vector.extract_strided_slice %223 {offsets = [0, 128], sizes = [2, 64], strides = [1, 1]} : vector<2x256xf32> to vector<2x64xf32>
    %227 = vector.extract_strided_slice %222 {offsets = [0, 192], sizes = [2, 64], strides = [1, 1]} : vector<2x256xf32> to vector<2x64xf32>
    %228 = arith.mulf %225, %210 : vector<2x64xf32>
    %229 = arith.mulf %224, %226 : vector<2x64xf32>
    %230 = arith.addf %228, %229 : vector<2x64xf32>
    %231 = math.tanh %230 : vector<2x64xf32>
    %232 = arith.mulf %227, %231 : vector<2x64xf32>
    %233 = vector.extract_strided_slice %8 {offsets = [14, 0], sizes = [2, 64], strides = [1, 1]} : vector<16x64xf32> to vector<2x64xf32>
    %cst_41 = arith.constant 0.000000e+00 : f32
    %234 = vector.broadcast %cst_41 : f32 to vector<2x64xf32>
    %235 = arith.cmpf ogt, %233, %234 : vector<2x64xf32>
    %236 = arith.select %235, %232, %207 : vector<2x64xi1>, vector<2x64xf32>
    %237 = arith.mulf %236, %233 : vector<2x64xf32>
    %238 = vector.extract_strided_slice %237 {offsets = [0, 0], sizes = [2, 32], strides = [1, 1]} : vector<2x64xf32> to vector<2x32xf32>
    %239 = vector.extract_strided_slice %237 {offsets = [0, 32], sizes = [2, 32], strides = [1, 1]} : vector<2x64xf32> to vector<2x32xf32>
    %240 = tpu.concatenate %38, %67, %96, %125, %154, %183, %212, %238 in 0 : vector<2x32xf32>, vector<2x32xf32>, vector<2x32xf32>, vector<2x32xf32>, vector<2x32xf32>, vector<2x32xf32>, vector<2x32xf32>, vector<2x32xf32> -> vector<16x32xf32>
    %241 = tpu.concatenate %239, %213, %184, %155, %126, %97, %68, %39 in 0 : vector<2x32xf32>, vector<2x32xf32>, vector<2x32xf32>, vector<2x32xf32>, vector<2x32xf32>, vector<2x32xf32>, vector<2x32xf32>, vector<2x32xf32> -> vector<16x32xf32>
    %242 = tpu.concatenate %240, %241 in 1 : vector<16x32xf32>, vector<16x32xf32> -> vector<16x64xf32>
    %c0_42 = arith.constant 0 : index
    %c0_43 = arith.constant 0 : index
    %243 = vector.load %arg11[%c0_42, %c0_43] : memref<16x64xf32, #tpu.memory_space<vmem>>, vector<16x64xf32>
    tpu.vector_store %arg11[%c0_42, %c0_43], %242 {strides = array<i32>} : memref<16x64xf32, #tpu.memory_space<vmem>>, vector<16x64xf32>,
    %244 = arith.truncf %242 : vector<16x64xf32> to vector<16x64xbf16>
    %c0_44 = arith.constant 0 : index
    %c0_45 = arith.constant 0 : index
    %245 = vector.load %arg6[%c0_44, %c0_45] : memref<64x32xbf16, #tpu.memory_space<vmem>>, vector<64x32xbf16>
    %cst_46 = arith.constant dense<0.000000e+00> : vector<16x32xf32>
    %246 = tpu.matmul %244, %245, %cst_46 {dimension_numbers = #tpu.dot_dimension_numbers<[1], [0], [0], [1], [0, 0, 1, 1], [], []>} : vector<16x64xbf16>, vector<64x32xbf16>, vector<16x32xf32> -> vector<16x32xf32>
    %c0_47 = arith.constant 0 : index
    %c0_48 = arith.constant 0 : index
    %247 = vector.load %arg7[%c0_47, %c0_48] : memref<1x32xf32, #tpu.memory_space<vmem>>, vector<1x32xf32>
    %248 = vector.broadcast %247 : vector<1x32xf32> to vector<16x32xf32>
    %249 = arith.addf %246, %248 : vector<16x32xf32>
    %c0_49 = arith.constant 0 : index
    %c0_50 = arith.constant 0 : index
    %250 = vector.load %arg8[%c0_49, %c0_50] : memref<16x32xbf16, #tpu.memory_space<vmem>>, vector<16x32xbf16>
    %c0_51 = arith.constant 0 : index
    %c0_52 = arith.constant 0 : index
    %251 = vector.load %arg9[%c0_51, %c0_52] : memref<32x16xbf16, #tpu.memory_space<vmem>>, vector<32x16xbf16>
    %c0_53 = arith.constant 0 : index
    %c0_54 = arith.constant 0 : index
    %252 = vector.load %arg10[%c0_53, %c0_54] : memref<1x16xf32, #tpu.memory_space<vmem>>, vector<1x16xf32>
    %253 = tpu.iota {dimensions = array<i32: 1>} : vector<2x16xi32>
    %254 = tpu.iota {dimensions = array<i32: 1>} : vector<2x16xi32>
    %cst_55 = arith.constant 0.000000e+00 : bf16
    %255 = vector.broadcast %cst_55 : bf16 to vector<2x16xbf16>
    %256 = vector.extract_strided_slice %249 {offsets = [0, 0], sizes = [2, 32], strides = [1, 1]} : vector<16x32xf32> to vector<2x32xf32>
    %cst_56 = arith.constant dense<0.000000e+00> : vector<2x32xf32>
    %257 = tpu.matmul %255, %250, %cst_56 {dimension_numbers = #tpu.dot_dimension_numbers<[1], [0], [0], [1], [0, 0, 1, 1], [], []>} : vector<2x16xbf16>, vector<16x32xbf16>, vector<2x32xf32> -> vector<2x32xf32>
    %258 = arith.addf %256, %257 : vector<2x32xf32>
    %259 = math.tanh %258 : vector<2x32xf32>
    %260 = arith.truncf %259 : vector<2x32xf32> to vector<2x32xbf16>
    %cst_57 = arith.constant dense<0.000000e+00> : vector<2x16xf32>
    %261 = tpu.matmul %260, %251, %cst_57 {dimension_numbers = #tpu.dot_dimension_numbers<[1], [0], [0], [1], [0, 0, 1, 1], [], []>} : vector<2x32xbf16>, vector<32x16xbf16>, vector<2x16xf32> -> vector<2x16xf32>
    %262 = vector.broadcast %252 : vector<1x16xf32> to vector<2x16xf32>
    %263 = arith.addf %261, %262 : vector<2x16xf32>
    %cst_58 = arith.constant dense<0xFF800000> : vector<2xf32>
    %264 = vector.multi_reduction <maximumf>, %263, %cst_58 [1] : vector<2x16xf32> to vector<2xf32>
    %265 = vector.shape_cast %264 : vector<2xf32> to vector<2x1xf32>
    %266 = vector.broadcast %265 : vector<2x1xf32> to vector<2x16xf32>
    %267 = arith.cmpf oeq, %263, %266 : vector<2x16xf32>
    %c16_i32 = arith.constant 16 : i32
    %268 = vector.broadcast %c16_i32 : i32 to vector<2x16xi32>
    %269 = arith.select %267, %253, %268 : vector<2x16xi1>, vector<2x16xi32>
    %cst_59 = arith.constant dense<2147483647> : vector<2xi32>
    %270 = vector.multi_reduction <minsi>, %269, %cst_59 [1] : vector<2x16xi32> to vector<2xi32>
    %271 = vector.shape_cast %270 : vector<2xi32> to vector<2x1xi32>
    %272 = vector.broadcast %271 : vector<2x1xi32> to vector<2x16xi32>
    %273 = arith.cmpi eq, %254, %272 : vector<2x16xi32>
    %274 = arith.extui %273 : vector<2x16xi1> to vector<2x16xi32>
    %275 = arith.sitofp %274 : vector<2x16xi32> to vector<2x16xf32>
    %276 = arith.truncf %275 : vector<2x16xf32> to vector<2x16xbf16>
    %277 = vector.extract_strided_slice %249 {offsets = [2, 0], sizes = [2, 32], strides = [1, 1]} : vector<16x32xf32> to vector<2x32xf32>
    %cst_60 = arith.constant dense<0.000000e+00> : vector<2x32xf32>
    %278 = tpu.matmul %276, %250, %cst_60 {dimension_numbers = #tpu.dot_dimension_numbers<[1], [0], [0], [1], [0, 0, 1, 1], [], []>} : vector<2x16xbf16>, vector<16x32xbf16>, vector<2x32xf32> -> vector<2x32xf32>
    %279 = arith.addf %277, %278 : vector<2x32xf32>
    %280 = math.tanh %279 : vector<2x32xf32>
    %281 = arith.truncf %280 : vector<2x32xf32> to vector<2x32xbf16>
    %cst_61 = arith.constant dense<0.000000e+00> : vector<2x16xf32>
    %282 = tpu.matmul %281, %251, %cst_61 {dimension_numbers = #tpu.dot_dimension_numbers<[1], [0], [0], [1], [0, 0, 1, 1], [], []>} : vector<2x32xbf16>, vector<32x16xbf16>, vector<2x16xf32> -> vector<2x16xf32>
    %283 = vector.broadcast %252 : vector<1x16xf32> to vector<2x16xf32>
    %284 = arith.addf %282, %283 : vector<2x16xf32>
    %cst_62 = arith.constant dense<0xFF800000> : vector<2xf32>
    %285 = vector.multi_reduction <maximumf>, %284, %cst_62 [1] : vector<2x16xf32> to vector<2xf32>
    %286 = vector.shape_cast %285 : vector<2xf32> to vector<2x1xf32>
    %287 = vector.broadcast %286 : vector<2x1xf32> to vector<2x16xf32>
    %288 = arith.cmpf oeq, %284, %287 : vector<2x16xf32>
    %c16_i32_63 = arith.constant 16 : i32
    %289 = vector.broadcast %c16_i32_63 : i32 to vector<2x16xi32>
    %290 = arith.select %288, %253, %289 : vector<2x16xi1>, vector<2x16xi32>
    %cst_64 = arith.constant dense<2147483647> : vector<2xi32>
    %291 = vector.multi_reduction <minsi>, %290, %cst_64 [1] : vector<2x16xi32> to vector<2xi32>
    %292 = vector.shape_cast %291 : vector<2xi32> to vector<2x1xi32>
    %293 = vector.broadcast %292 : vector<2x1xi32> to vector<2x16xi32>
    %294 = arith.cmpi eq, %254, %293 : vector<2x16xi32>
    %295 = arith.extui %294 : vector<2x16xi1> to vector<2x16xi32>
    %296 = arith.sitofp %295 : vector<2x16xi32> to vector<2x16xf32>
    %297 = arith.truncf %296 : vector<2x16xf32> to vector<2x16xbf16>
    %298 = vector.extract_strided_slice %249 {offsets = [4, 0], sizes = [2, 32], strides = [1, 1]} : vector<16x32xf32> to vector<2x32xf32>
    %cst_65 = arith.constant dense<0.000000e+00> : vector<2x32xf32>
    %299 = tpu.matmul %297, %250, %cst_65 {dimension_numbers = #tpu.dot_dimension_numbers<[1], [0], [0], [1], [0, 0, 1, 1], [], []>} : vector<2x16xbf16>, vector<16x32xbf16>, vector<2x32xf32> -> vector<2x32xf32>
    %300 = arith.addf %298, %299 : vector<2x32xf32>
    %301 = math.tanh %300 : vector<2x32xf32>
    %302 = arith.truncf %301 : vector<2x32xf32> to vector<2x32xbf16>
    %cst_66 = arith.constant dense<0.000000e+00> : vector<2x16xf32>
    %303 = tpu.matmul %302, %251, %cst_66 {dimension_numbers = #tpu.dot_dimension_numbers<[1], [0], [0], [1], [0, 0, 1, 1], [], []>} : vector<2x32xbf16>, vector<32x16xbf16>, vector<2x16xf32> -> vector<2x16xf32>
    %304 = vector.broadcast %252 : vector<1x16xf32> to vector<2x16xf32>
    %305 = arith.addf %303, %304 : vector<2x16xf32>
    %cst_67 = arith.constant dense<0xFF800000> : vector<2xf32>
    %306 = vector.multi_reduction <maximumf>, %305, %cst_67 [1] : vector<2x16xf32> to vector<2xf32>
    %307 = vector.shape_cast %306 : vector<2xf32> to vector<2x1xf32>
    %308 = vector.broadcast %307 : vector<2x1xf32> to vector<2x16xf32>
    %309 = arith.cmpf oeq, %305, %308 : vector<2x16xf32>
    %c16_i32_68 = arith.constant 16 : i32
    %310 = vector.broadcast %c16_i32_68 : i32 to vector<2x16xi32>
    %311 = arith.select %309, %253, %310 : vector<2x16xi1>, vector<2x16xi32>
    %cst_69 = arith.constant dense<2147483647> : vector<2xi32>
    %312 = vector.multi_reduction <minsi>, %311, %cst_69 [1] : vector<2x16xi32> to vector<2xi32>
    %313 = vector.shape_cast %312 : vector<2xi32> to vector<2x1xi32>
    %314 = vector.broadcast %313 : vector<2x1xi32> to vector<2x16xi32>
    %315 = arith.cmpi eq, %254, %314 : vector<2x16xi32>
    %316 = arith.extui %315 : vector<2x16xi1> to vector<2x16xi32>
    %317 = arith.sitofp %316 : vector<2x16xi32> to vector<2x16xf32>
    %318 = arith.truncf %317 : vector<2x16xf32> to vector<2x16xbf16>
    %319 = vector.extract_strided_slice %249 {offsets = [6, 0], sizes = [2, 32], strides = [1, 1]} : vector<16x32xf32> to vector<2x32xf32>
    %cst_70 = arith.constant dense<0.000000e+00> : vector<2x32xf32>
    %320 = tpu.matmul %318, %250, %cst_70 {dimension_numbers = #tpu.dot_dimension_numbers<[1], [0], [0], [1], [0, 0, 1, 1], [], []>} : vector<2x16xbf16>, vector<16x32xbf16>, vector<2x32xf32> -> vector<2x32xf32>
    %321 = arith.addf %319, %320 : vector<2x32xf32>
    %322 = math.tanh %321 : vector<2x32xf32>
    %323 = arith.truncf %322 : vector<2x32xf32> to vector<2x32xbf16>
    %cst_71 = arith.constant dense<0.000000e+00> : vector<2x16xf32>
    %324 = tpu.matmul %323, %251, %cst_71 {dimension_numbers = #tpu.dot_dimension_numbers<[1], [0], [0], [1], [0, 0, 1, 1], [], []>} : vector<2x32xbf16>, vector<32x16xbf16>, vector<2x16xf32> -> vector<2x16xf32>
    %325 = vector.broadcast %252 : vector<1x16xf32> to vector<2x16xf32>
    %326 = arith.addf %324, %325 : vector<2x16xf32>
    %cst_72 = arith.constant dense<0xFF800000> : vector<2xf32>
    %327 = vector.multi_reduction <maximumf>, %326, %cst_72 [1] : vector<2x16xf32> to vector<2xf32>
    %328 = vector.shape_cast %327 : vector<2xf32> to vector<2x1xf32>
    %329 = vector.broadcast %328 : vector<2x1xf32> to vector<2x16xf32>
    %330 = arith.cmpf oeq, %326, %329 : vector<2x16xf32>
    %c16_i32_73 = arith.constant 16 : i32
    %331 = vector.broadcast %c16_i32_73 : i32 to vector<2x16xi32>
    %332 = arith.select %330, %253, %331 : vector<2x16xi1>, vector<2x16xi32>
    %cst_74 = arith.constant dense<2147483647> : vector<2xi32>
    %333 = vector.multi_reduction <minsi>, %332, %cst_74 [1] : vector<2x16xi32> to vector<2xi32>
    %334 = vector.shape_cast %333 : vector<2xi32> to vector<2x1xi32>
    %335 = vector.broadcast %334 : vector<2x1xi32> to vector<2x16xi32>
    %336 = arith.cmpi eq, %254, %335 : vector<2x16xi32>
    %337 = arith.extui %336 : vector<2x16xi1> to vector<2x16xi32>
    %338 = arith.sitofp %337 : vector<2x16xi32> to vector<2x16xf32>
    %339 = arith.truncf %338 : vector<2x16xf32> to vector<2x16xbf16>
    %340 = vector.extract_strided_slice %249 {offsets = [8, 0], sizes = [2, 32], strides = [1, 1]} : vector<16x32xf32> to vector<2x32xf32>
    %cst_75 = arith.constant dense<0.000000e+00> : vector<2x32xf32>
    %341 = tpu.matmul %339, %250, %cst_75 {dimension_numbers = #tpu.dot_dimension_numbers<[1], [0], [0], [1], [0, 0, 1, 1], [], []>} : vector<2x16xbf16>, vector<16x32xbf16>, vector<2x32xf32> -> vector<2x32xf32>
    %342 = arith.addf %340, %341 : vector<2x32xf32>
    %343 = math.tanh %342 : vector<2x32xf32>
    %344 = arith.truncf %343 : vector<2x32xf32> to vector<2x32xbf16>
    %cst_76 = arith.constant dense<0.000000e+00> : vector<2x16xf32>
    %345 = tpu.matmul %344, %251, %cst_76 {dimension_numbers = #tpu.dot_dimension_numbers<[1], [0], [0], [1], [0, 0, 1, 1], [], []>} : vector<2x32xbf16>, vector<32x16xbf16>, vector<2x16xf32> -> vector<2x16xf32>
    %346 = vector.broadcast %252 : vector<1x16xf32> to vector<2x16xf32>
    %347 = arith.addf %345, %346 : vector<2x16xf32>
    %cst_77 = arith.constant dense<0xFF800000> : vector<2xf32>
    %348 = vector.multi_reduction <maximumf>, %347, %cst_77 [1] : vector<2x16xf32> to vector<2xf32>
    %349 = vector.shape_cast %348 : vector<2xf32> to vector<2x1xf32>
    %350 = vector.broadcast %349 : vector<2x1xf32> to vector<2x16xf32>
    %351 = arith.cmpf oeq, %347, %350 : vector<2x16xf32>
    %c16_i32_78 = arith.constant 16 : i32
    %352 = vector.broadcast %c16_i32_78 : i32 to vector<2x16xi32>
    %353 = arith.select %351, %253, %352 : vector<2x16xi1>, vector<2x16xi32>
    %cst_79 = arith.constant dense<2147483647> : vector<2xi32>
    %354 = vector.multi_reduction <minsi>, %353, %cst_79 [1] : vector<2x16xi32> to vector<2xi32>
    %355 = vector.shape_cast %354 : vector<2xi32> to vector<2x1xi32>
    %356 = vector.broadcast %355 : vector<2x1xi32> to vector<2x16xi32>
    %357 = arith.cmpi eq, %254, %356 : vector<2x16xi32>
    %358 = arith.extui %357 : vector<2x16xi1> to vector<2x16xi32>
    %359 = arith.sitofp %358 : vector<2x16xi32> to vector<2x16xf32>
    %360 = arith.truncf %359 : vector<2x16xf32> to vector<2x16xbf16>
    %361 = vector.extract_strided_slice %249 {offsets = [10, 0], sizes = [2, 32], strides = [1, 1]} : vector<16x32xf32> to vector<2x32xf32>
    %cst_80 = arith.constant dense<0.000000e+00> : vector<2x32xf32>
    %362 = tpu.matmul %360, %250, %cst_80 {dimension_numbers = #tpu.dot_dimension_numbers<[1], [0], [0], [1], [0, 0, 1, 1], [], []>} : vector<2x16xbf16>, vector<16x32xbf16>, vector<2x32xf32> -> vector<2x32xf32>
    %363 = arith.addf %361, %362 : vector<2x32xf32>
    %364 = math.tanh %363 : vector<2x32xf32>
    %365 = arith.truncf %364 : vector<2x32xf32> to vector<2x32xbf16>
    %cst_81 = arith.constant dense<0.000000e+00> : vector<2x16xf32>
    %366 = tpu.matmul %365, %251, %cst_81 {dimension_numbers = #tpu.dot_dimension_numbers<[1], [0], [0], [1], [0, 0, 1, 1], [], []>} : vector<2x32xbf16>, vector<32x16xbf16>, vector<2x16xf32> -> vector<2x16xf32>
    %367 = vector.broadcast %252 : vector<1x16xf32> to vector<2x16xf32>
    %368 = arith.addf %366, %367 : vector<2x16xf32>
    %cst_82 = arith.constant dense<0xFF800000> : vector<2xf32>
    %369 = vector.multi_reduction <maximumf>, %368, %cst_82 [1] : vector<2x16xf32> to vector<2xf32>
    %370 = vector.shape_cast %369 : vector<2xf32> to vector<2x1xf32>
    %371 = vector.broadcast %370 : vector<2x1xf32> to vector<2x16xf32>
    %372 = arith.cmpf oeq, %368, %371 : vector<2x16xf32>
    %c16_i32_83 = arith.constant 16 : i32
    %373 = vector.broadcast %c16_i32_83 : i32 to vector<2x16xi32>
    %374 = arith.select %372, %253, %373 : vector<2x16xi1>, vector<2x16xi32>
    %cst_84 = arith.constant dense<2147483647> : vector<2xi32>
    %375 = vector.multi_reduction <minsi>, %374, %cst_84 [1] : vector<2x16xi32> to vector<2xi32>
    %376 = vector.shape_cast %375 : vector<2xi32> to vector<2x1xi32>
    %377 = vector.broadcast %376 : vector<2x1xi32> to vector<2x16xi32>
    %378 = arith.cmpi eq, %254, %377 : vector<2x16xi32>
    %379 = arith.extui %378 : vector<2x16xi1> to vector<2x16xi32>
    %380 = arith.sitofp %379 : vector<2x16xi32> to vector<2x16xf32>
    %381 = arith.truncf %380 : vector<2x16xf32> to vector<2x16xbf16>
    %382 = vector.extract_strided_slice %249 {offsets = [12, 0], sizes = [2, 32], strides = [1, 1]} : vector<16x32xf32> to vector<2x32xf32>
    %cst_85 = arith.constant dense<0.000000e+00> : vector<2x32xf32>
    %383 = tpu.matmul %381, %250, %cst_85 {dimension_numbers = #tpu.dot_dimension_numbers<[1], [0], [0], [1], [0, 0, 1, 1], [], []>} : vector<2x16xbf16>, vector<16x32xbf16>, vector<2x32xf32> -> vector<2x32xf32>
    %384 = arith.addf %382, %383 : vector<2x32xf32>
    %385 = math.tanh %384 : vector<2x32xf32>
    %386 = arith.truncf %385 : vector<2x32xf32> to vector<2x32xbf16>
    %cst_86 = arith.constant dense<0.000000e+00> : vector<2x16xf32>
    %387 = tpu.matmul %386, %251, %cst_86 {dimension_numbers = #tpu.dot_dimension_numbers<[1], [0], [0], [1], [0, 0, 1, 1], [], []>} : vector<2x32xbf16>, vector<32x16xbf16>, vector<2x16xf32> -> vector<2x16xf32>
    %388 = vector.broadcast %252 : vector<1x16xf32> to vector<2x16xf32>
    %389 = arith.addf %387, %388 : vector<2x16xf32>
    %cst_87 = arith.constant dense<0xFF800000> : vector<2xf32>
    %390 = vector.multi_reduction <maximumf>, %389, %cst_87 [1] : vector<2x16xf32> to vector<2xf32>
    %391 = vector.shape_cast %390 : vector<2xf32> to vector<2x1xf32>
    %392 = vector.broadcast %391 : vector<2x1xf32> to vector<2x16xf32>
    %393 = arith.cmpf oeq, %389, %392 : vector<2x16xf32>
    %c16_i32_88 = arith.constant 16 : i32
    %394 = vector.broadcast %c16_i32_88 : i32 to vector<2x16xi32>
    %395 = arith.select %393, %253, %394 : vector<2x16xi1>, vector<2x16xi32>
    %cst_89 = arith.constant dense<2147483647> : vector<2xi32>
    %396 = vector.multi_reduction <minsi>, %395, %cst_89 [1] : vector<2x16xi32> to vector<2xi32>
    %397 = vector.shape_cast %396 : vector<2xi32> to vector<2x1xi32>
    %398 = vector.broadcast %397 : vector<2x1xi32> to vector<2x16xi32>
    %399 = arith.cmpi eq, %254, %398 : vector<2x16xi32>
    %400 = arith.extui %399 : vector<2x16xi1> to vector<2x16xi32>
    %401 = arith.sitofp %400 : vector<2x16xi32> to vector<2x16xf32>
    %402 = arith.truncf %401 : vector<2x16xf32> to vector<2x16xbf16>
    %403 = vector.extract_strided_slice %249 {offsets = [14, 0], sizes = [2, 32], strides = [1, 1]} : vector<16x32xf32> to vector<2x32xf32>
    %cst_90 = arith.constant dense<0.000000e+00> : vector<2x32xf32>
    %404 = tpu.matmul %402, %250, %cst_90 {dimension_numbers = #tpu.dot_dimension_numbers<[1], [0], [0], [1], [0, 0, 1, 1], [], []>} : vector<2x16xbf16>, vector<16x32xbf16>, vector<2x32xf32> -> vector<2x32xf32>
    %405 = arith.addf %403, %404 : vector<2x32xf32>
    %406 = math.tanh %405 : vector<2x32xf32>
    %407 = arith.truncf %406 : vector<2x32xf32> to vector<2x32xbf16>
    %cst_91 = arith.constant dense<0.000000e+00> : vector<2x16xf32>
    %408 = tpu.matmul %407, %251, %cst_91 {dimension_numbers = #tpu.dot_dimension_numbers<[1], [0], [0], [1], [0, 0, 1, 1], [], []>} : vector<2x32xbf16>, vector<32x16xbf16>, vector<2x16xf32> -> vector<2x16xf32>
    %409 = vector.broadcast %252 : vector<1x16xf32> to vector<2x16xf32>
    %410 = arith.addf %408, %409 : vector<2x16xf32>
    %411 = tpu.concatenate %263, %284, %305, %326, %347, %368, %389, %410 in 0 : vector<2x16xf32>, vector<2x16xf32>, vector<2x16xf32>, vector<2x16xf32>, vector<2x16xf32>, vector<2x16xf32>, vector<2x16xf32>, vector<2x16xf32> -> vector<16x16xf32>
    %c0_92 = arith.constant 0 : index
    %c0_93 = arith.constant 0 : index
    %412 = vector.load %arg12[%c0_92, %c0_93] : memref<16x16xf32, #tpu.memory_space<vmem>>, vector<16x16xf32>
    tpu.vector_store %arg12[%c0_92, %c0_93], %411 {strides = array<i32>} : memref<16x16xf32, #tpu.memory_space<vmem>>, vector<16x16xf32>,
    return
  }
  func.func @transform_0(%arg0: i32) -> (i32, i32) {
    %c0_i32 = arith.constant 0 : i32
    %c0_i32_0 = arith.constant 0 : i32
    %c0_i32_1 = arith.constant 0 : i32
    return %c0_i32, %c0_i32_0 : i32, i32
  }
  func.func @transform_1(%arg0: i32) -> (i32, i32) {
    %c0_i32 = arith.constant 0 : i32
    %c0_i32_0 = arith.constant 0 : i32
    %c0_i32_1 = arith.constant 0 : i32
    return %c0_i32, %c0_i32_0 : i32, i32
  }
  func.func @transform_2(%arg0: i32) -> (i32, i32) {
    %c0_i32 = arith.constant 0 : i32
    %c0_i32_0 = arith.constant 0 : i32
    %c0_i32_1 = arith.constant 0 : i32
    return %c0_i32, %c0_i32_0 : i32, i32
  }
  func.func @transform_3(%arg0: i32) -> (i32, i32) {
    %c0_i32 = arith.constant 0 : i32
    %c0_i32_0 = arith.constant 0 : i32
    %c0_i32_1 = arith.constant 0 : i32
    return %c0_i32, %c0_i32_0 : i32, i32
  }
  func.func @transform_4(%arg0: i32) -> (i32, i32) {
    %c0_i32 = arith.constant 0 : i32
    %c0_i32_0 = arith.constant 0 : i32
    %c0_i32_1 = arith.constant 0 : i32
    return %c0_i32, %c0_i32_0 : i32, i32
  }
  func.func @transform_5(%arg0: i32) -> (i32, i32) {
    %c0_i32 = arith.constant 0 : i32
    %c0_i32_0 = arith.constant 0 : i32
    %c0_i32_1 = arith.constant 0 : i32
    return %c0_i32, %c0_i32_0 : i32, i32
  }
  func.func @transform_6(%arg0: i32) -> (i32, i32) {
    %c0_i32 = arith.constant 0 : i32
    %c0_i32_0 = arith.constant 0 : i32
    %c0_i32_1 = arith.constant 0 : i32
    return %c0_i32, %c0_i32_0 : i32, i32
  }
  func.func @transform_7(%arg0: i32) -> (i32, i32) {
    %c0_i32 = arith.constant 0 : i32
    %c0_i32_0 = arith.constant 0 : i32
    %c0_i32_1 = arith.constant 0 : i32
    return %c0_i32, %c0_i32_0 : i32, i32
  }
  func.func @transform_8(%arg0: i32) -> (i32, i32) {
    %c0_i32 = arith.constant 0 : i32
    %c0_i32_0 = arith.constant 0 : i32
    %c0_i32_1 = arith.constant 0 : i32
    return %c0_i32, %c0_i32_0 : i32, i32
  }
  func.func @transform_9(%arg0: i32) -> (i32, i32) {
    %c0_i32 = arith.constant 0 : i32
    %c0_i32_0 = arith.constant 0 : i32
    %c0_i32_1 = arith.constant 0 : i32
    return %c0_i32, %c0_i32_0 : i32, i32
  }
  func.func @transform_10(%arg0: i32) -> (i32, i32) {
    %c0_i32 = arith.constant 0 : i32
    %c0_i32_0 = arith.constant 0 : i32
    %c0_i32_1 = arith.constant 0 : i32
    return %c0_i32, %c0_i32_0 : i32, i32
  }
  func.func @transform_11(%arg0: i32) -> (i32, i32) {
    %c0_i32 = arith.constant 0 : i32
    %c0_i32_0 = arith.constant 0 : i32
    %c0_i32_1 = arith.constant 0 : i32
    return %c0_i32, %c0_i32_0 : i32, i32
  }
}

</mosaic_0001>

<llo_original>
// kernel: ac_seg_forward.1
$region0: #{ac_seg_forward.1}
  #allocation0 [shape = 'u32[]', space=smem, size = 0x4, offset = 0x4, fixed_abs, tag = 'smem constant byte address 0x4 - core index']
  #allocation1 [shape = 'u32[144,128]{1,0:T(1,128)}', space=vmem, size = 0x12000, scoped, tag = 'internal scratch']
  %s0 = inlined_call_operand.vmem [shape: f32[16,64], index: 0, kind: input, shape index: {}]
  %s1 = inlined_call_operand.vmem [shape: f32[16,64], index: 1, kind: input, shape index: {}]
  %s2 = inlined_call_operand.vmem [shape: bf16[64,256], index: 2, kind: input, shape index: {}]
  %s3 = inlined_call_operand.vmem [shape: bf16[64,256], index: 3, kind: input, shape index: {}]
  %s4 = inlined_call_operand.vmem [shape: f32[1,256], index: 4, kind: input, shape index: {}]
  %s5 = inlined_call_operand.vmem [shape: bf16[64,32], index: 5, kind: input, shape index: {}]
  %s6 = inlined_call_operand.vmem [shape: f32[1,32], index: 6, kind: input, shape index: {}]
  %s7 = inlined_call_operand.vmem [shape: bf16[16,32], index: 7, kind: input, shape index: {}]
  %s8 = inlined_call_operand.vmem [shape: bf16[32,16], index: 8, kind: input, shape index: {}]
  %s9 = inlined_call_operand.vmem [shape: f32[1,16], index: 9, kind: input, shape index: {}]
  %s10 = inlined_call_operand.vmem [shape: f32[16,64], index: 10, kind: output, shape index: {0}]
  %s11 = inlined_call_operand.vmem [shape: f32[16,16], index: 11, kind: output, shape index: {1}]
  %12 = xla_tuple %s10, %s11
  %s13 = sld [smem:[#allocation0]]
  $region58: #{ac_seg_forward.1} parent=0
    _
  %s15 = ssub.s32 1, %s13
  %s16 = scalar_select 0, %s15, %s13
  // Predicated region
  $region2: #{ac_seg_forward.1} parent=0 // pred_check
    _
  $region3: #{ac_seg_forward.1} parent=0 // pred_check_branch
    %18 = sbr.rel (0) target = $region5
  $region4: #{ac_seg_forward.1} parent=0 // pred_region
    _
  $region5: #{ac_seg_forward.1} parent=0 // pred_fallthru
    _
  // Predicated region
  $region6: #{ac_seg_forward.1} parent=0 // pred_check
    _
  $region7: #{ac_seg_forward.1} parent=0 // pred_check_branch
    %20 = sbr.rel (0) target = $region9
  $region8: #{ac_seg_forward.1} parent=0 // pred_region
    _
  $region9: #{ac_seg_forward.1} parent=0 // pred_fallthru
    _
  // Predicated region
  $region10: #{ac_seg_forward.1} parent=0 // pred_check
    _
  $region11: #{ac_seg_forward.1} parent=0 // pred_check_branch
    %22 = sbr.rel (0) target = $region13
  $region12: #{ac_seg_forward.1} parent=0 // pred_region
    _
  $region13: #{ac_seg_forward.1} parent=0 // pred_fallthru
    _
  // Predicated region
  $region14: #{ac_seg_forward.1} parent=0 // pred_check
    _
  $region15: #{ac_seg_forward.1} parent=0 // pred_check_branch
    %24 = sbr.rel (0) target = $region17
  $region16: #{ac_seg_forward.1} parent=0 // pred_region
    _
  $region17: #{ac_seg_forward.1} parent=0 // pred_fallthru
    _
  // Predicated region
  $region18: #{ac_seg_forward.1} parent=0 // pred_check
    _
  $region19: #{ac_seg_forward.1} parent=0 // pred_check_branch
    %26 = sbr.rel (0) target = $region21
  $region20: #{ac_seg_forward.1} parent=0 // pred_region
    _
  $region21: #{ac_seg_forward.1} parent=0 // pred_fallthru
    _
  // Predicated region
  $region22: #{ac_seg_forward.1} parent=0 // pred_check
    _
  $region23: #{ac_seg_forward.1} parent=0 // pred_check_branch
    %28 = sbr.rel (0) target = $region25
  $region24: #{ac_seg_forward.1} parent=0 // pred_region
    _
  $region25: #{ac_seg_forward.1} parent=0 // pred_fallthru
    _
  // Predicated region
  $region26: #{ac_seg_forward.1} parent=0 // pred_check
    _
  $region27: #{ac_seg_forward.1} parent=0 // pred_check_branch
    %30 = sbr.rel (0) target = $region29
  $region28: #{ac_seg_forward.1} parent=0 // pred_region
    _
  $region29: #{ac_seg_forward.1} parent=0 // pred_fallthru
    _
  // Predicated region
  $region30: #{ac_seg_forward.1} parent=0 // pred_check
    _
  $region31: #{ac_seg_forward.1} parent=0 // pred_check_branch
    %32 = sbr.rel (0) target = $region33
  $region32: #{ac_seg_forward.1} parent=0 // pred_region
    _
  $region33: #{ac_seg_forward.1} parent=0 // pred_fallthru
    _
  // Predicated region
  $region34: #{ac_seg_forward.1} parent=0 // pred_check
    _
  $region35: #{ac_seg_forward.1} parent=0 // pred_check_branch
    %34 = sbr.rel (0) target = $region37
  $region36: #{ac_seg_forward.1} parent=0 // pred_region
    _
  $region37: #{ac_seg_forward.1} parent=0 // pred_fallthru
    _
  // Predicated region
  $region38: #{ac_seg_forward.1} parent=0 // pred_check
    _
  $region39: #{ac_seg_forward.1} parent=0 // pred_check_branch
    %36 = sbr.rel (0) target = $region41
  $region40: #{ac_seg_forward.1} parent=0 // pred_region
    _
  $region41: #{ac_seg_forward.1} parent=0 // pred_fallthru
    _
  %v38 = vld [vmem:[%s0] sm:$0xff]
  %v39 = vld [vmem:[%s0 + $0x8] sm:$0xff]
  %v40 = vpack.c.bf16 %v39, %v38
  %v41 = vld [vmem:[%s2] sm:$0xff]
  %v42 = vld [vmem:[%s2 + $0x8] sm:$0xff]
  %v43 = vld [vmem:[%s2 + $0x10] sm:$0xff]
  %v44 = vld [vmem:[%s2 + $0x18] sm:$0xff]
  %v45 = vld [vmem:[%s2 + $0x20] sm:$0xff]
  %v46 = vld [vmem:[%s2 + $0x28] sm:$0xff]
  %v47 = vld [vmem:[%s2 + $0x30] sm:$0xff]
  %v48 = vld [vmem:[%s2 + $0x38] sm:$0xff]
  %v49 = vld [vmem:[%s4] sm:$0x3]
  %v51 = vlaneseq
  %v52 = vshrl.u32 %v51, 7
  %v53 = vsub.s32 0, %v52
  %v54 = vrot.slane %v49, %v53
  %v55 = vlaneseq
  %v56 = vshrl.u32 %v55, 7
  %v57 = vsub.s32 1, %v56
  %v58 = vrot.slane %v49, %v57
  %v69 = vunpack.c.l.b16 %v41
  %v70 = vunpack.c.h.b16 %v41
  %v71 = vunpack.c.l.b16 %v42
  %v72 = vunpack.c.h.b16 %v42
  %v73 = vunpack.c.l.b16 %v43
  %v74 = vunpack.c.h.b16 %v43
  %v75 = vunpack.c.l.b16 %v44
  %v76 = vunpack.c.h.b16 %v44
  %v77 = vunpack.c.l.b16 %v45
  %v78 = vunpack.c.h.b16 %v45
  %v79 = vunpack.c.l.b16 %v46
  %v80 = vunpack.c.h.b16 %v46
  %v81 = vunpack.c.l.b16 %v47
  %v82 = vunpack.c.h.b16 %v47
  %v83 = vunpack.c.l.b16 %v48
  %v84 = vunpack.c.h.b16 %v48
  %v85 = vpack.c.b16 %v71, %v69
  %v86 = vpack.c.b16 %v72, %v70
  %v87 = vpack.c.b16 %v75, %v73
  %v88 = vpack.c.b16 %v76, %v74
  %v89 = vpack.c.b16 %v79, %v77
  %v90 = vpack.c.b16 %v80, %v78
  %v91 = vpack.c.b16 %v83, %v81
  %v92 = vpack.c.b16 %v84, %v82
  %vm101 = vcmask 523264
  %v103 = vsel %vm101, %v40, 0
  %105 = vmatprep.subr.bf16.mxu0 %v86
  %106 = vmatpush1.bf16.msra.mxu0 %v85
  %107 = vmatprep.subr.bf16.mxu0 %v88
  %108 = vmatpush1.bf16.msra.mxu0 %v87
  %109 = vmatprep.subr.bf16.mxu0 %v90
  %110 = vmatpush1.bf16.msra.mxu0 %v89
  %111 = vmatprep.subr.bf16.mxu0 %v92
  %112 = vmatpush1.bf16.msra.mxu0 %v91
  %113 = vmatprep.subr.bf16.mxu0 0
  %114 = vmatpush1.bf16.msra.mxu0 0
  %115 = vmatprep.subr.bf16.mxu0 0
  %116 = vmatpush1.bf16.msra.mxu0 0
  %117 = vmatprep.subr.bf16.mxu0 0
  %118 = vmatpush1.bf16.msra.mxu0 0
  %119 = vmatprep.subr.bf16.mxu0 0
  %120 = vmatpush1.bf16.msra.mxu0 0
  %121 = vmatprep.subr.bf16.mxu0 0
  %122 = vmatpush1.bf16.msra.mxu0 0
  %123 = vmatprep.subr.bf16.mxu0 0
  %124 = vmatpush1.bf16.msra.mxu0 0
  %125 = vmatprep.subr.bf16.mxu0 0
  %126 = vmatpush1.bf16.msra.mxu0 0
  %127 = vmatprep.subr.bf16.mxu0 0
  %128 = vmatpush1.bf16.msra.mxu0 0
  %129 = vmatprep.subr.bf16.mxu0 0
  %130 = vmatpush1.bf16.msra.mxu0 0
  %131 = vmatprep.subr.bf16.mxu0 0
  %132 = vmatpush1.bf16.msra.mxu0 0
  %133 = vmatprep.subr.bf16.mxu0 0
  %134 = vmatpush1.bf16.msra.mxu0 0
  %135 = vmatprep.subr.bf16.mxu0 0
  %136 = vmatpush1.bf16.msra.mxu0 0
  %137 = vmatprep.mubr.bf16.mxu0 0
  %138 = vmatmul.mubr.bf16.gmra.mrb[0].mxu0 %v103
  %v139 = vpop.f32.mrb[0].mxu0
  %v140 = vadd.f32 %v54, %v139
  %v141 = vpop.f32.mrb[0].mxu0
  %v142 = vadd.f32 %v58, %v141
  %v143 = vpop.f32.mrb[0].mxu0
  %v144 = vadd.f32 %v54, %v143
  %v145 = vpop.f32.mrb[0].mxu0
  %v146 = vadd.f32 %v58, %v145
  %147 = vdwg.mxu0
  %v148 = vld [vmem:[%s3] sm:$0xff]
  %v149 = vld [vmem:[%s3 + $0x8] sm:$0xff]
  %v150 = vld [vmem:[%s3 + $0x10] sm:$0xff]
  %v151 = vld [vmem:[%s3 + $0x18] sm:$0xff]
  %v152 = vld [vmem:[%s3 + $0x20] sm:$0xff]
  %v153 = vld [vmem:[%s3 + $0x28] sm:$0xff]
  %v154 = vld [vmem:[%s3 + $0x30] sm:$0xff]
  %v155 = vld [vmem:[%s3 + $0x38] sm:$0xff]
  %v156 = vld [vmem:[%s1] sm:$0xff]
  %v157 = vld [vmem:[%s1 + $0x8] sm:$0xff]
  %v166 = vunpack.c.l.b16 %v148
  %v167 = vunpack.c.h.b16 %v148
  %v168 = vunpack.c.l.b16 %v149
  %v169 = vunpack.c.h.b16 %v149
  %v170 = vunpack.c.l.b16 %v150
  %v171 = vunpack.c.h.b16 %v150
  %v172 = vunpack.c.l.b16 %v151
  %v173 = vunpack.c.h.b16 %v151
  %v174 = vunpack.c.l.b16 %v152
  %v175 = vunpack.c.h.b16 %v152
  %v176 = vunpack.c.l.b16 %v153
  %v177 = vunpack.c.h.b16 %v153
  %v178 = vunpack.c.l.b16 %v154
  %v179 = vunpack.c.h.b16 %v154
  %v180 = vunpack.c.l.b16 %v155
  %v181 = vunpack.c.h.b16 %v155
  %v182 = vpack.c.b16 %v168, %v166
  %v183 = vpack.c.b16 %v169, %v167
  %v184 = vpack.c.b16 %v172, %v170
  %v185 = vpack.c.b16 %v173, %v171
  %v186 = vpack.c.b16 %v176, %v174
  %v187 = vpack.c.b16 %v177, %v175
  %v188 = vpack.c.b16 %v180, %v178
  %v189 = vpack.c.b16 %v181, %v179
  %v199 = vsel %vm101, 0, 0
  %201 = vmatprep.subr.bf16.mxu0 %v183
  %202 = vmatpush1.bf16.msra.mxu0 %v182
  %203 = vmatprep.subr.bf16.mxu0 %v185
  %204 = vmatpush1.bf16.msra.mxu0 %v184
  %205 = vmatprep.subr.bf16.mxu0 %v187
  %206 = vmatpush1.bf16.msra.mxu0 %v186
  %207 = vmatprep.subr.bf16.mxu0 %v189
  %208 = vmatpush1.bf16.msra.mxu0 %v188
  %209 = vmatprep.subr.bf16.mxu0 0
  %210 = vmatpush1.bf16.msra.mxu0 0
  %211 = vmatprep.subr.bf16.mxu0 0
  %212 = vmatpush1.bf16.msra.mxu0 0
  %213 = vmatprep.subr.bf16.mxu0 0
  %214 = vmatpush1.bf16.msra.mxu0 0
  %215 = vmatprep.subr.bf16.mxu0 0
  %216 = vmatpush1.bf16.msra.mxu0 0
  %217 = vmatprep.subr.bf16.mxu0 0
  %218 = vmatpush1.bf16.msra.mxu0 0
  %219 = vmatprep.subr.bf16.mxu0 0
  %220 = vmatpush1.bf16.msra.mxu0 0
  %221 = vmatprep.subr.bf16.mxu0 0
  %222 = vmatpush1.bf16.msra.mxu0 0
  %223 = vmatprep.subr.bf16.mxu0 0
  %224 = vmatpush1.bf16.msra.mxu0 0
  %225 = vmatprep.subr.bf16.mxu0 0
  %226 = vmatpush1.bf16.msra.mxu0 0
  %227 = vmatprep.subr.bf16.mxu0 0
  %228 = vmatpush1.bf16.msra.mxu0 0
  %229 = vmatprep.subr.bf16.mxu0 0
  %230 = vmatpush1.bf16.msra.mxu0 0
  %231 = vmatprep.subr.bf16.mxu0 0
  %232 = vmatpush1.bf16.msra.mxu0 0
  %233 = vmatprep.mubr.bf16.mxu0 0
  %234 = vmatmul.mubr.bf16.gmra.mrb[0].mxu0 %v199
  %v235 = vpop.f32.mrb[0].mxu0
  %v236 = vadd.f32 0.0, %v235
  %v237 = vpop.f32.mrb[0].mxu0
  %v238 = vadd.f32 0.0, %v237
  %v239 = vpop.f32.mrb[0].mxu0
  %v240 = vpop.f32.mrb[0].mxu0
  %241 = vdwg.mxu0
  %v242 = vadd.f32 %v140, %v236
  %v243 = vadd.f32 %v142, %v238
  %v244 = vxor.u32 %v242, 2147483648
  %v245 = vxor.u32 %v243, 2147483648
  %v246 = vmul.f32 %v244, 1.442695
  %v247 = vpow.pop %v246
  %v248 = vmul.f32 %v245, 1.442695
  %v249 = vpow.pop %v248
  %v250 = vadd.f32 %v247, 1.0
  %v251 = vadd.f32 %v249, 1.0
  %v252 = vrcp.pop %v250
  %v253 = vmul.f32 1.0, %v252
  %v254 = vrcp.pop %v251
  %v255 = vmul.f32 1.0, %v254
  %v256 = vtanh.pop %v243
  %v257 = vmul.f32 %v253, 0.0
  %v258 = vmul.f32 %v253, %v256
  %260 = vrot.lane.b32.xlu0 %v258, 64
  %v261 = vpop.permute.xlu0 %260
  %v263 = vadd.f32 %v257, %v261
  %v264 = vtanh.pop %v263
  %v265 = vmul.f32 %v255, %v264
  %vm266 = vcmp.gt.f32.partialorder %v156, 0.0
  %268 = vrot.lane.b32.xlu0 %v265, 64
  %v269 = vpop.permute.xlu0 %268
  %v271 = vsel %vm266, %v269, 0.0
  %273 = vrot.lane.b32.xlu0 %v263, 64
  %v274 = vpop.permute.xlu0 %273
  %v276 = vsel %vm266, %v274, 0.0
  %v277 = vmul.f32 %v271, %v156
  %v278 = vpack.c.bf16 %v271, %v271
  %v280 = vsel %vm101, %v278, 0
  %282 = vmatprep.subr.bf16.mxu0 %v183
  %283 = vmatpush1.bf16.msra.mxu0 %v182
  %284 = vmatprep.subr.bf16.mxu0 %v185
  %285 = vmatpush1.bf16.msra.mxu0 %v184
  %286 = vmatprep.subr.bf16.mxu0 %v187
  %287 = vmatpush1.bf16.msra.mxu0 %v186
  %288 = vmatprep.subr.bf16.mxu0 %v189
  %289 = vmatpush1.bf16.msra.mxu0 %v188
  %290 = vmatprep.subr.bf16.mxu0 0
  %291 = vmatpush1.bf16.msra.mxu0 0
  %292 = vmatprep.subr.bf16.mxu0 0
  %293 = vmatpush1.bf16.msra.mxu0 0
  %294 = vmatprep.subr.bf16.mxu0 0
  %295 = vmatpush1.bf16.msra.mxu0 0
  %296 = vmatprep.subr.bf16.mxu0 0
  %297 = vmatpush1.bf16.msra.mxu0 0
  %298 = vmatprep.subr.bf16.mxu0 0
  %299 = vmatpush1.bf16.msra.mxu0 0
  %300 = vmatprep.subr.bf16.mxu0 0
  %301 = vmatpush1.bf16.msra.mxu0 0
  %302 = vmatprep.subr.bf16.mxu0 0
  %303 = vmatpush1.bf16.msra.mxu0 0
  %304 = vmatprep.subr.bf16.mxu0 0
  %305 = vmatpush1.bf16.msra.mxu0 0
  %306 = vmatprep.subr.bf16.mxu0 0
  %307 = vmatpush1.bf16.msra.mxu0 0
  %308 = vmatprep.subr.bf16.mxu0 0
  %309 = vmatpush1.bf16.msra.mxu0 0
  %310 = vmatprep.subr.bf16.mxu0 0
  %311 = vmatpush1.bf16.msra.mxu0 0
  %312 = vmatprep.subr.bf16.mxu0 0
  %313 = vmatpush1.bf16.msra.mxu0 0
  %314 = vmatprep.mubr.bf16.mxu0 0
  %315 = vmatmul.mubr.bf16.gmra.mrb[0].mxu0 %v280
  %v316 = vpop.f32.mrb[0].mxu0
  %v317 = vadd.f32 0.0, %v316
  %v318 = vpop.f32.mrb[0].mxu0
  %v319 = vadd.f32 0.0, %v318
  %v320 = vpop.f32.mrb[0].mxu0
  %v321 = vpop.f32.mrb[0].mxu0
  %322 = vdwg.mxu0
  %v325 = vrot.slane %v317, 6
  %v326 = vrot.slane %v319, 6
  %v329 = vadd.f32 %v140, %v325
  %v330 = vadd.f32 %v142, %v326
  %v331 = vxor.u32 %v329, 2147483648
  %v332 = vxor.u32 %v330, 2147483648
  %v333 = vmul.f32 %v331, 1.442695
  %v334 = vpow.pop %v333
  %v335 = vmul.f32 %v332, 1.442695
  %v336 = vpow.pop %v335
  %v337 = vadd.f32 %v334, 1.0
  %v338 = vadd.f32 %v336, 1.0
  %v339 = vrcp.pop %v337
  %v340 = vmul.f32 1.0, %v339
  %v341 = vrcp.pop %v338
  %v342 = vmul.f32 1.0, %v341
  %v343 = vtanh.pop %v330
  %v345 = vrot.slane %v276, 6
  %346 = vrot.lane.b32.xlu0 %v345, 64
  %v347 = vpop.permute.xlu0 %346
  %v349 = vmul.f32 %v340, %v347
  %v350 = vmul.f32 %v340, %v343
  %352 = vrot.lane.b32.xlu0 %v350, 64
  %v353 = vpop.permute.xlu0 %352
  %v355 = vadd.f32 %v349, %v353
  %v356 = vtanh.pop %v355
  %v357 = vmul.f32 %v342, %v356
  %359 = vrot.lane.b32.xlu0 %v357, 64
  %v360 = vpop.permute.xlu0 %359
  %v363 = vrot.slane %v271, 6
  %v365 = vsel %vm266, %v360, %v363
  %367 = vrot.lane.b32.xlu0 %v355, 64
  %v368 = vpop.permute.xlu0 %367
  %v371 = vsel %vm266, %v368, %v345
  %v372 = vmul.f32 %v365, %v156
  %v373 = vpack.c.bf16 %v365, %v365
  %v375 = vrot.slane %v373, 1
  %v377 = vsel %vm101, %v375, 0
  %379 = vmatprep.subr.bf16.mxu0 %v183
  %380 = vmatpush1.bf16.msra.mxu0 %v182
  %381 = vmatprep.subr.bf16.mxu0 %v185
  %382 = vmatpush1.bf16.msra.mxu0 %v184
  %383 = vmatprep.subr.bf16.mxu0 %v187
  %384 = vmatpush1.bf16.msra.mxu0 %v186
  %385 = vmatprep.subr.bf16.mxu0 %v189
  %386 = vmatpush1.bf16.msra.mxu0 %v188
  %387 = vmatprep.subr.bf16.mxu0 0
  %388 = vmatpush1.bf16.msra.mxu0 0
  %389 = vmatprep.subr.bf16.mxu0 0
  %390 = vmatpush1.bf16.msra.mxu0 0
  %391 = vmatprep.subr.bf16.mxu0 0
  %392 = vmatpush1.bf16.msra.mxu0 0
  %393 = vmatprep.subr.bf16.mxu0 0
  %394 = vmatpush1.bf16.msra.mxu0 0
  %395 = vmatprep.subr.bf16.mxu0 0
  %396 = vmatpush1.bf16.msra.mxu0 0
  %397 = vmatprep.subr.bf16.mxu0 0
  %398 = vmatpush1.bf16.msra.mxu0 0
  %399 = vmatprep.subr.bf16.mxu0 0
  %400 = vmatpush1.bf16.msra.mxu0 0
  %401 = vmatprep.subr.bf16.mxu0 0
  %402 = vmatpush1.bf16.msra.mxu0 0
  %403 = vmatprep.subr.bf16.mxu0 0
  %404 = vmatpush1.bf16.msra.mxu0 0
  %405 = vmatprep.subr.bf16.mxu0 0
  %406 = vmatpush1.bf16.msra.mxu0 0
  %407 = vmatprep.subr.bf16.mxu0 0
  %408 = vmatpush1.bf16.msra.mxu0 0
  %409 = vmatprep.subr.bf16.mxu0 0
  %410 = vmatpush1.bf16.msra.mxu0 0
  %411 = vmatprep.mubr.bf16.mxu0 0
  %412 = vmatmul.mubr.bf16.gmra.mrb[0].mxu0 %v377
  %v413 = vpop.f32.mrb[0].mxu0
  %v414 = vadd.f32 0.0, %v413
  %v415 = vpop.f32.mrb[0].mxu0
  %v416 = vadd.f32 0.0, %v415
  %v417 = vpop.f32.mrb[0].mxu0
  %v418 = vpop.f32.mrb[0].mxu0
  %419 = vdwg.mxu0
  %v422 = vrot.slane %v414, 4
  %v423 = vrot.slane %v416, 4
  %v426 = vadd.f32 %v140, %v422
  %v427 = vadd.f32 %v142, %v423
  %v428 = vxor.u32 %v426, 2147483648
  %v429 = vxor.u32 %v427, 2147483648
  %v430 = vmul.f32 %v428, 1.442695
  %v431 = vpow.pop %v430
  %v432 = vmul.f32 %v429, 1.442695
  %v433 = vpow.pop %v432
  %v434 = vadd.f32 %v431, 1.0
  %v435 = vadd.f32 %v433, 1.0
  %v436 = vrcp.pop %v434
  %v437 = vmul.f32 1.0, %v436
  %v438 = vrcp.pop %v435
  %v439 = vmul.f32 1.0, %v438
  %v440 = vtanh.pop %v427
  %v442 = vrot.slane %v371, 6
  %443 = vrot.lane.b32.xlu0 %v442, 64
  %v444 = vpop.permute.xlu0 %443
  %v446 = vmul.f32 %v437, %v444
  %v447 = vmul.f32 %v437, %v440
  %449 = vrot.lane.b32.xlu0 %v447, 64
  %v450 = vpop.permute.xlu0 %449
  %v452 = vadd.f32 %v446, %v450
  %v453 = vtanh.pop %v452
  %v454 = vmul.f32 %v439, %v453
  %456 = vrot.lane.b32.xlu0 %v454, 64
  %v457 = vpop.permute.xlu0 %456
  %v460 = vrot.slane %v365, 6
  %v462 = vsel %vm266, %v457, %v460
  %464 = vrot.lane.b32.xlu0 %v452, 64
  %v465 = vpop.permute.xlu0 %464
  %v468 = vsel %vm266, %v465, %v442
  %v469 = vmul.f32 %v462, %v156
  %v470 = vpack.c.bf16 %v462, %v462
  %v472 = vrot.slane %v470, 2
  %v474 = vsel %vm101, %v472, 0
  %476 = vmatprep.subr.bf16.mxu0 %v183
  %477 = vmatpush1.bf16.msra.mxu0 %v182
  %478 = vmatprep.subr.bf16.mxu0 %v185
  %479 = vmatpush1.bf16.msra.mxu0 %v184
  %480 = vmatprep.subr.bf16.mxu0 %v187
  %481 = vmatpush1.bf16.msra.mxu0 %v186
  %482 = vmatprep.subr.bf16.mxu0 %v189
  %483 = vmatpush1.bf16.msra.mxu0 %v188
  %484 = vmatprep.subr.bf16.mxu0 0
  %485 = vmatpush1.bf16.msra.mxu0 0
  %486 = vmatprep.subr.bf16.mxu0 0
  %487 = vmatpush1.bf16.msra.mxu0 0
  %488 = vmatprep.subr.bf16.mxu0 0
  %489 = vmatpush1.bf16.msra.mxu0 0
  %490 = vmatprep.subr.bf16.mxu0 0
  %491 = vmatpush1.bf16.msra.mxu0 0
  %492 = vmatprep.subr.bf16.mxu0 0
  %493 = vmatpush1.bf16.msra.mxu0 0
  %494 = vmatprep.subr.bf16.mxu0 0
  %495 = vmatpush1.bf16.msra.mxu0 0
  %496 = vmatprep.subr.bf16.mxu0 0
  %497 = vmatpush1.bf16.msra.mxu0 0
  %498 = vmatprep.subr.bf16.mxu0 0
  %499 = vmatpush1.bf16.msra.mxu0 0
  %500 = vmatprep.subr.bf16.mxu0 0
  %501 = vmatpush1.bf16.msra.mxu0 0
  %502 = vmatprep.subr.bf16.mxu0 0
  %503 = vmatpush1.bf16.msra.mxu0 0
  %504 = vmatprep.subr.bf16.mxu0 0
  %505 = vmatpush1.bf16.msra.mxu0 0
  %506 = vmatprep.subr.bf16.mxu0 0
  %507 = vmatpush1.bf16.msra.mxu0 0
  %508 = vmatprep.mubr.bf16.mxu0 0
  %509 = vmatmul.mubr.bf16.gmra.mrb[0].mxu0 %v474
  %v510 = vpop.f32.mrb[0].mxu0
  %v511 = vadd.f32 0.0, %v510
  %v512 = vpop.f32.mrb[0].mxu0
  %v513 = vadd.f32 0.0, %v512
  %v514 = vpop.f32.mrb[0].mxu0
  %v515 = vpop.f32.mrb[0].mxu0
  %516 = vdwg.mxu0
  %v519 = vrot.slane %v511, 2
  %v520 = vrot.slane %v513, 2
  %v523 = vadd.f32 %v140, %v519
  %v524 = vadd.f32 %v142, %v520
  %v525 = vxor.u32 %v523, 2147483648
  %v526 = vxor.u32 %v524, 2147483648
  %v527 = vmul.f32 %v525, 1.442695
  %v528 = vpow.pop %v527
  %v529 = vmul.f32 %v526, 1.442695
  %v530 = vpow.pop %v529
  %v531 = vadd.f32 %v528, 1.0
  %v532 = vadd.f32 %v530, 1.0
  %v533 = vrcp.pop %v531
  %v534 = vmul.f32 1.0, %v533
  %v535 = vrcp.pop %v532
  %v536 = vmul.f32 1.0, %v535
  %v537 = vtanh.pop %v524
  %v539 = vrot.slane %v468, 6
  %540 = vrot.lane.b32.xlu0 %v539, 64
  %v541 = vpop.permute.xlu0 %540
  %v543 = vmul.f32 %v534, %v541
  %v544 = vmul.f32 %v534, %v537
  %546 = vrot.lane.b32.xlu0 %v544, 64
  %v547 = vpop.permute.xlu0 %546
  %v549 = vadd.f32 %v543, %v547
  %v550 = vtanh.pop %v549
  %v551 = vmul.f32 %v536, %v550
  %553 = vrot.lane.b32.xlu0 %v551, 64
  %v554 = vpop.permute.xlu0 %553
  %v557 = vrot.slane %v462, 6
  %v559 = vsel %vm266, %v554, %v557
  %561 = vrot.lane.b32.xlu0 %v549, 64
  %v562 = vpop.permute.xlu0 %561
  %v565 = vsel %vm266, %v562, %v539
  %v566 = vmul.f32 %v559, %v156
  %v567 = vpack.c.bf16 %v559, %v559
  %v569 = vrot.slane %v567, 3
  %v571 = vsel %vm101, %v569, 0
  %573 = vmatprep.subr.bf16.mxu0 %v183
  %574 = vmatpush1.bf16.msra.mxu0 %v182
  %575 = vmatprep.subr.bf16.mxu0 %v185
  %576 = vmatpush1.bf16.msra.mxu0 %v184
  %577 = vmatprep.subr.bf16.mxu0 %v187
  %578 = vmatpush1.bf16.msra.mxu0 %v186
  %579 = vmatprep.subr.bf16.mxu0 %v189
  %580 = vmatpush1.bf16.msra.mxu0 %v188
  %581 = vmatprep.subr.bf16.mxu0 0
  %582 = vmatpush1.bf16.msra.mxu0 0
  %583 = vmatprep.subr.bf16.mxu0 0
  %584 = vmatpush1.bf16.msra.mxu0 0
  %585 = vmatprep.subr.bf16.mxu0 0
  %586 = vmatpush1.bf16.msra.mxu0 0
  %587 = vmatprep.subr.bf16.mxu0 0
  %588 = vmatpush1.bf16.msra.mxu0 0
  %589 = vmatprep.subr.bf16.mxu0 0
  %590 = vmatpush1.bf16.msra.mxu0 0
  %591 = vmatprep.subr.bf16.mxu0 0
  %592 = vmatpush1.bf16.msra.mxu0 0
  %593 = vmatprep.subr.bf16.mxu0 0
  %594 = vmatpush1.bf16.msra.mxu0 0
  %595 = vmatprep.subr.bf16.mxu0 0
  %596 = vmatpush1.bf16.msra.mxu0 0
  %597 = vmatprep.subr.bf16.mxu0 0
  %598 = vmatpush1.bf16.msra.mxu0 0
  %599 = vmatprep.subr.bf16.mxu0 0
  %600 = vmatpush1.bf16.msra.mxu0 0
  %601 = vmatprep.subr.bf16.mxu0 0
  %602 = vmatpush1.bf16.msra.mxu0 0
  %603 = vmatprep.subr.bf16.mxu0 0
  %604 = vmatpush1.bf16.msra.mxu0 0
  %605 = vmatprep.mubr.bf16.mxu0 0
  %606 = vmatmul.mubr.bf16.gmra.mrb[0].mxu0 %v571
  %v607 = vpop.f32.mrb[0].mxu0
  %v608 = vadd.f32 0.0, %v607
  %v609 = vpop.f32.mrb[0].mxu0
  %v610 = vadd.f32 0.0, %v609
  %v611 = vpop.f32.mrb[0].mxu0
  %v612 = vpop.f32.mrb[0].mxu0
  %613 = vdwg.mxu0
  %v614 = vadd.f32 %v144, %v608
  %v615 = vadd.f32 %v146, %v610
  %v616 = vxor.u32 %v614, 2147483648
  %v617 = vxor.u32 %v615, 2147483648
  %v618 = vmul.f32 %v616, 1.442695
  %v619 = vpow.pop %v618
  %v620 = vmul.f32 %v617, 1.442695
  %v621 = vpow.pop %v620
  %v622 = vadd.f32 %v619, 1.0
  %v623 = vadd.f32 %v621, 1.0
  %v624 = vrcp.pop %v622
  %v625 = vmul.f32 1.0, %v624
  %v626 = vrcp.pop %v623
  %v627 = vmul.f32 1.0, %v626
  %v628 = vtanh.pop %v615
  %v630 = vrot.slane %v565, 6
  %631 = vrot.lane.b32.xlu0 %v630, 64
  %v632 = vpop.permute.xlu0 %631
  %v634 = vmul.f32 %v625, %v632
  %v635 = vmul.f32 %v625, %v628
  %637 = vrot.lane.b32.xlu0 %v635, 64
  %v638 = vpop.permute.xlu0 %637
  %v640 = vadd.f32 %v634, %v638
  %v641 = vtanh.pop %v640
  %v642 = vmul.f32 %v627, %v641
  %vm643 = vcmp.gt.f32.partialorder %v157, 0.0
  %645 = vrot.lane.b32.xlu0 %v642, 64
  %v646 = vpop.permute.xlu0 %645
  %v649 = vrot.slane %v559, 6
  %v651 = vsel %vm643, %v646, %v649
  %653 = vrot.lane.b32.xlu0 %v640, 64
  %v654 = vpop.permute.xlu0 %653
  %v657 = vsel %vm643, %v654, %v630
  %v658 = vmul.f32 %v651, %v157
  %v659 = vpack.c.bf16 %v651, %v651
  %v661 = vsel %vm101, %v659, 0
  %663 = vmatprep.subr.bf16.mxu0 %v183
  %664 = vmatpush1.bf16.msra.mxu0 %v182
  %665 = vmatprep.subr.bf16.mxu0 %v185
  %666 = vmatpush1.bf16.msra.mxu0 %v184
  %667 = vmatprep.subr.bf16.mxu0 %v187
  %668 = vmatpush1.bf16.msra.mxu0 %v186
  %669 = vmatprep.subr.bf16.mxu0 %v189
  %670 = vmatpush1.bf16.msra.mxu0 %v188
  %671 = vmatprep.subr.bf16.mxu0 0
  %672 = vmatpush1.bf16.msra.mxu0 0
  %673 = vmatprep.subr.bf16.mxu0 0
  %674 = vmatpush1.bf16.msra.mxu0 0
  %675 = vmatprep.subr.bf16.mxu0 0
  %676 = vmatpush1.bf16.msra.mxu0 0
  %677 = vmatprep.subr.bf16.mxu0 0
  %678 = vmatpush1.bf16.msra.mxu0 0
  %679 = vmatprep.subr.bf16.mxu0 0
  %680 = vmatpush1.bf16.msra.mxu0 0
  %681 = vmatprep.subr.bf16.mxu0 0
  %682 = vmatpush1.bf16.msra.mxu0 0
  %683 = vmatprep.subr.bf16.mxu0 0
  %684 = vmatpush1.bf16.msra.mxu0 0
  %685 = vmatprep.subr.bf16.mxu0 0
  %686 = vmatpush1.bf16.msra.mxu0 0
  %687 = vmatprep.subr.bf16.mxu0 0
  %688 = vmatpush1.bf16.msra.mxu0 0
  %689 = vmatprep.subr.bf16.mxu0 0
  %690 = vmatpush1.bf16.msra.mxu0 0
  %691 = vmatprep.subr.bf16.mxu0 0
  %692 = vmatpush1.bf16.msra.mxu0 0
  %693 = vmatprep.subr.bf16.mxu0 0
  %694 = vmatpush1.bf16.msra.mxu0 0
  %695 = vmatprep.mubr.bf16.mxu0 0
  %696 = vmatmul.mubr.bf16.gmra.mrb[0].mxu0 %v661
  %v697 = vpop.f32.mrb[0].mxu0
  %v698 = vadd.f32 0.0, %v697
  %v699 = vpop.f32.mrb[0].mxu0
  %v700 = vadd.f32 0.0, %v699
  %v701 = vpop.f32.mrb[0].mxu0
  %v702 = vpop.f32.mrb[0].mxu0
  %703 = vdwg.mxu0
  %v706 = vrot.slane %v698, 6
  %v707 = vrot.slane %v700, 6
  %v710 = vadd.f32 %v144, %v706
  %v711 = vadd.f32 %v146, %v707
  %v712 = vxor.u32 %v710, 2147483648
  %v713 = vxor.u32 %v711, 2147483648
  %v714 = vmul.f32 %v712, 1.442695
  %v715 = vpow.pop %v714
  %v716 = vmul.f32 %v713, 1.442695
  %v717 = vpow.pop %v716
  %v718 = vadd.f32 %v715, 1.0
  %v719 = vadd.f32 %v717, 1.0
  %v720 = vrcp.pop %v718
  %v721 = vmul.f32 1.0, %v720
  %v722 = vrcp.pop %v719
  %v723 = vmul.f32 1.0, %v722
  %v724 = vtanh.pop %v711
  %v726 = vrot.slane %v657, 6
  %727 = vrot.lane.b32.xlu0 %v726, 64
  %v728 = vpop.permute.xlu0 %727
  %v730 = vmul.f32 %v721, %v728
  %v731 = vmul.f32 %v721, %v724
  %733 = vrot.lane.b32.xlu0 %v731, 64
  %v734 = vpop.permute.xlu0 %733
  %v736 = vadd.f32 %v730, %v734
  %v737 = vtanh.pop %v736
  %v738 = vmul.f32 %v723, %v737
  %740 = vrot.lane.b32.xlu0 %v738, 64
  %v741 = vpop.permute.xlu0 %740
  %v744 = vrot.slane %v651, 6
  %v746 = vsel %vm643, %v741, %v744
  %748 = vrot.lane.b32.xlu0 %v736, 64
  %v749 = vpop.permute.xlu0 %748
  %v752 = vsel %vm643, %v749, %v726
  %v753 = vmul.f32 %v746, %v157
  %v754 = vpack.c.bf16 %v746, %v746
  %v756 = vrot.slane %v754, 1
  %v758 = vsel %vm101, %v756, 0
  %760 = vmatprep.subr.bf16.mxu0 %v183
  %761 = vmatpush1.bf16.msra.mxu0 %v182
  %762 = vmatprep.subr.bf16.mxu0 %v185
  %763 = vmatpush1.bf16.msra.mxu0 %v184
  %764 = vmatprep.subr.bf16.mxu0 %v187
  %765 = vmatpush1.bf16.msra.mxu0 %v186
  %766 = vmatprep.subr.bf16.mxu0 %v189
  %767 = vmatpush1.bf16.msra.mxu0 %v188
  %768 = vmatprep.subr.bf16.mxu0 0
  %769 = vmatpush1.bf16.msra.mxu0 0
  %770 = vmatprep.subr.bf16.mxu0 0
  %771 = vmatpush1.bf16.msra.mxu0 0
  %772 = vmatprep.subr.bf16.mxu0 0
  %773 = vmatpush1.bf16.msra.mxu0 0
  %774 = vmatprep.subr.bf16.mxu0 0
  %775 = vmatpush1.bf16.msra.mxu0 0
  %776 = vmatprep.subr.bf16.mxu0 0
  %777 = vmatpush1.bf16.msra.mxu0 0
  %778 = vmatprep.subr.bf16.mxu0 0
  %779 = vmatpush1.bf16.msra.mxu0 0
  %780 = vmatprep.subr.bf16.mxu0 0
  %781 = vmatpush1.bf16.msra.mxu0 0
  %782 = vmatprep.subr.bf16.mxu0 0
  %783 = vmatpush1.bf16.msra.mxu0 0
  %784 = vmatprep.subr.bf16.mxu0 0
  %785 = vmatpush1.bf16.msra.mxu0 0
  %786 = vmatprep.subr.bf16.mxu0 0
  %787 = vmatpush1.bf16.msra.mxu0 0
  %788 = vmatprep.subr.bf16.mxu0 0
  %789 = vmatpush1.bf16.msra.mxu0 0
  %790 = vmatprep.subr.bf16.mxu0 0
  %791 = vmatpush1.bf16.msra.mxu0 0
  %792 = vmatprep.mubr.bf16.mxu0 0
  %793 = vmatmul.mubr.bf16.gmra.mrb[0].mxu0 %v758
  %v794 = vpop.f32.mrb[0].mxu0
  %v795 = vadd.f32 0.0, %v794
  %v796 = vpop.f32.mrb[0].mxu0
  %v797 = vadd.f32 0.0, %v796
  %v798 = vpop.f32.mrb[0].mxu0
  %v799 = vpop.f32.mrb[0].mxu0
  %800 = vdwg.mxu0
  %v803 = vrot.slane %v795, 4
  %v804 = vrot.slane %v797, 4
  %v807 = vadd.f32 %v144, %v803
  %v808 = vadd.f32 %v146, %v804
  %v809 = vxor.u32 %v807, 2147483648
  %v810 = vxor.u32 %v808, 2147483648
  %v811 = vmul.f32 %v809, 1.442695
  %v812 = vpow.pop %v811
  %v813 = vmul.f32 %v810, 1.442695
  %v814 = vpow.pop %v813
  %v815 = vadd.f32 %v812, 1.0
  %v816 = vadd.f32 %v814, 1.0
  %v817 = vrcp.pop %v815
  %v818 = vmul.f32 1.0, %v817
  %v819 = vrcp.pop %v816
  %v820 = vmul.f32 1.0, %v819
  %v821 = vtanh.pop %v808
  %v823 = vrot.slane %v752, 6
  %824 = vrot.lane.b32.xlu0 %v823, 64
  %v825 = vpop.permute.xlu0 %824
  %v827 = vmul.f32 %v818, %v825
  %v828 = vmul.f32 %v818, %v821
  %830 = vrot.lane.b32.xlu0 %v828, 64
  %v831 = vpop.permute.xlu0 %830
  %v833 = vadd.f32 %v827, %v831
  %v834 = vtanh.pop %v833
  %v835 = vmul.f32 %v820, %v834
  %837 = vrot.lane.b32.xlu0 %v835, 64
  %v838 = vpop.permute.xlu0 %837
  %v841 = vrot.slane %v746, 6
  %v843 = vsel %vm643, %v838, %v841
  %845 = vrot.lane.b32.xlu0 %v833, 64
  %v846 = vpop.permute.xlu0 %845
  %v849 = vsel %vm643, %v846, %v823
  %v850 = vmul.f32 %v843, %v157
  %v851 = vpack.c.bf16 %v843, %v843
  %v853 = vrot.slane %v851, 2
  %v855 = vsel %vm101, %v853, 0
  %857 = vmatprep.subr.bf16.mxu0 %v183
  %858 = vmatpush1.bf16.msra.mxu0 %v182
  %859 = vmatprep.subr.bf16.mxu0 %v185
  %860 = vmatpush1.bf16.msra.mxu0 %v184
  %861 = vmatprep.subr.bf16.mxu0 %v187
  %862 = vmatpush1.bf16.msra.mxu0 %v186
  %863 = vmatprep.subr.bf16.mxu0 %v189
  %864 = vmatpush1.bf16.msra.mxu0 %v188
  %865 = vmatprep.subr.bf16.mxu0 0
  %866 = vmatpush1.bf16.msra.mxu0 0
  %867 = vmatprep.subr.bf16.mxu0 0
  %868 = vmatpush1.bf16.msra.mxu0 0
  %869 = vmatprep.subr.bf16.mxu0 0
  %870 = vmatpush1.bf16.msra.mxu0 0
  %871 = vmatprep.subr.bf16.mxu0 0
  %872 = vmatpush1.bf16.msra.mxu0 0
  %873 = vmatprep.subr.bf16.mxu0 0
  %874 = vmatpush1.bf16.msra.mxu0 0
  %875 = vmatprep.subr.bf16.mxu0 0
  %876 = vmatpush1.bf16.msra.mxu0 0
  %877 = vmatprep.subr.bf16.mxu0 0
  %878 = vmatpush1.bf16.msra.mxu0 0
  %879 = vmatprep.subr.bf16.mxu0 0
  %880 = vmatpush1.bf16.msra.mxu0 0
  %881 = vmatprep.subr.bf16.mxu0 0
  %882 = vmatpush1.bf16.msra.mxu0 0
  %883 = vmatprep.subr.bf16.mxu0 0
  %884 = vmatpush1.bf16.msra.mxu0 0
  %885 = vmatprep.subr.bf16.mxu0 0
  %886 = vmatpush1.bf16.msra.mxu0 0
  %887 = vmatprep.subr.bf16.mxu0 0
  %888 = vmatpush1.bf16.msra.mxu0 0
  %889 = vmatprep.mubr.bf16.mxu0 0
  %890 = vmatmul.mubr.bf16.gmra.mrb[0].mxu0 %v855
  %v891 = vpop.f32.mrb[0].mxu0
  %v892 = vadd.f32 0.0, %v891
  %v893 = vpop.f32.mrb[0].mxu0
  %v894 = vadd.f32 0.0, %v893
  %v895 = vpop.f32.mrb[0].mxu0
  %v896 = vpop.f32.mrb[0].mxu0
  %897 = vdwg.mxu0
  %v900 = vrot.slane %v892, 2
  %v901 = vrot.slane %v894, 2
  %v904 = vadd.f32 %v144, %v900
  %v905 = vadd.f32 %v146, %v901
  %v906 = vxor.u32 %v904, 2147483648
  %v907 = vxor.u32 %v905, 2147483648
  %v908 = vmul.f32 %v906, 1.442695
  %v909 = vpow.pop %v908
  %v910 = vmul.f32 %v907, 1.442695
  %v911 = vpow.pop %v910
  %v912 = vadd.f32 %v909, 1.0
  %v913 = vadd.f32 %v911, 1.0
  %v914 = vrcp.pop %v912
  %v915 = vmul.f32 1.0, %v914
  %v916 = vrcp.pop %v913
  %v917 = vmul.f32 1.0, %v916
  %v918 = vtanh.pop %v905
  %v920 = vrot.slane %v849, 6
  %921 = vrot.lane.b32.xlu0 %v920, 64
  %v922 = vpop.permute.xlu0 %921
  %v924 = vmul.f32 %v915, %v922
  %v925 = vmul.f32 %v915, %v918
  %927 = vrot.lane.b32.xlu0 %v925, 64
  %v928 = vpop.permute.xlu0 %927
  %v930 = vadd.f32 %v924, %v928
  %v931 = vtanh.pop %v930
  %v932 = vmul.f32 %v917, %v931
  %934 = vrot.lane.b32.xlu0 %v932, 64
  %v935 = vpop.permute.xlu0 %934
  %v938 = vrot.slane %v843, 6
  %v940 = vsel %vm643, %v935, %v938
  %v941 = vmul.f32 %v940, %v157
  %vm942 = vcmask 1041408
  %v943 = vsel %vm942, %v277, %v372
  %vm944 = vcmask 1043456
  %v945 = vsel %vm944, %v943, %v469
  %vm946 = vcmask 1045504
  %v947 = vsel %vm946, %v945, %v566
  %v948 = vsel %vm942, %v658, %v753
  %v949 = vsel %vm944, %v948, %v850
  %v950 = vsel %vm946, %v949, %v941
  %v952 = vrot.slane %v941, 6
  %v955 = vrot.slane %v850, 2
  %v958 = vrot.slane %v753, 6
  %v961 = vrot.slane %v658, 2
  %v964 = vrot.slane %v566, 6
  %v967 = vrot.slane %v469, 2
  %v970 = vrot.slane %v372, 6
  %v973 = vrot.slane %v277, 2
  %v975 = vsel %vm942, %v952, %v955
  %v976 = vsel %vm944, %v975, %v958
  %v977 = vsel %vm946, %v976, %v961
  %v978 = vsel %vm942, %v964, %v967
  %v979 = vsel %vm944, %v978, %v970
  %v980 = vsel %vm946, %v979, %v973
  %vm981 = vcmask 261120
  %v982 = vsel %vm981, %v947, %v977
  %v983 = vsel %vm981, %v950, %v980
  %984 = vst.msk [vmem:[%s10] sm:$0xff] %vm101, %v982
  %985 = vst.msk [vmem:[%s10 + $0x8] sm:$0xff] %vm101, %v983
  %v986 = vpack.c.bf16 %v983, %v982
  %v987 = vld [vmem:[%s5] sm:$0xf]
  %v988 = vld [vmem:[%s5 + $0x4] sm:$0xf]
  %v989 = vld [vmem:[%s5 + $0x8] sm:$0xf]
  %v990 = vld [vmem:[%s5 + $0xc] sm:$0xf]
  %v991 = vld [vmem:[%s5 + $0x10] sm:$0xf]
  %v992 = vld [vmem:[%s5 + $0x14] sm:$0xf]
  %v993 = vld [vmem:[%s5 + $0x18] sm:$0xf]
  %v994 = vld [vmem:[%s5 + $0x1c] sm:$0xf]
  %v995 = vld [vmem:[%s6] sm:$0x1]
  %v997 = vlaneseq
  %v998 = vshrl.u32 %v997, 7
  %v999 = vsub.s32 0, %v998
  %v1000 = vrot.slane %v995, %v999
  %v1010 = vunpack.c.l.b16 %v987
  %v1011 = vunpack.c.l.b16 %v988
  %v1012 = vunpack.c.l.b16 %v989
  %v1013 = vunpack.c.l.b16 %v990
  %v1014 = vunpack.c.l.b16 %v991
  %v1015 = vunpack.c.l.b16 %v992
  %v1016 = vunpack.c.l.b16 %v993
  %v1017 = vunpack.c.l.b16 %v994
  %v1018 = vpack.c.b16 %v1011, %v1010
  %v1019 = vpack.c.b16 %v1013, %v1012
  %v1020 = vpack.c.b16 %v1015, %v1014
  %v1021 = vpack.c.b16 %v1017, %v1016
  %v1027 = vsel %vm101, %v986, 0
  %1029 = vmatprep.subr.bf16.mxu0 0
  %1030 = vmatpush1.bf16.msra.mxu0 %v1018
  %1031 = vmatprep.subr.bf16.mxu0 0
  %1032 = vmatpush1.bf16.msra.mxu0 %v1019
  %1033 = vmatprep.subr.bf16.mxu0 0
  %1034 = vmatpush1.bf16.msra.mxu0 %v1020
  %1035 = vmatprep.subr.bf16.mxu0 0
  %1036 = vmatpush1.bf16.msra.mxu0 %v1021
  %1037 = vmatprep.subr.bf16.mxu0 0
  %1038 = vmatpush1.bf16.msra.mxu0 0
  %1039 = vmatprep.subr.bf16.mxu0 0
  %1040 = vmatpush1.bf16.msra.mxu0 0
  %1041 = vmatprep.subr.bf16.mxu0 0
  %1042 = vmatpush1.bf16.msra.mxu0 0
  %1043 = vmatprep.subr.bf16.mxu0 0
  %1044 = vmatpush1.bf16.msra.mxu0 0
  %1045 = vmatprep.subr.bf16.mxu0 0
  %1046 = vmatpush1.bf16.msra.mxu0 0
  %1047 = vmatprep.subr.bf16.mxu0 0
  %1048 = vmatpush1.bf16.msra.mxu0 0
  %1049 = vmatprep.subr.bf16.mxu0 0
  %1050 = vmatpush1.bf16.msra.mxu0 0
  %1051 = vmatprep.subr.bf16.mxu0 0
  %1052 = vmatpush1.bf16.msra.mxu0 0
  %1053 = vmatprep.subr.bf16.mxu0 0
  %1054 = vmatpush1.bf16.msra.mxu0 0
  %1055 = vmatprep.subr.bf16.mxu0 0
  %1056 = vmatpush1.bf16.msra.mxu0 0
  %1057 = vmatprep.subr.bf16.mxu0 0
  %1058 = vmatpush1.bf16.msra.mxu0 0
  %1059 = vmatprep.subr.bf16.mxu0 0
  %1060 = vmatpush1.bf16.msra.mxu0 0
  %1061 = vmatprep.mubr.bf16.mxu0 0
  %1062 = vmatmul.mubr.bf16.gmra.mrb[0].mxu0 %v1027
  %v1063 = vpop.f32.mrb[0].mxu0
  %v1064 = vadd.f32 %v1000, %v1063
  %v1065 = vpop.f32.mrb[0].mxu0
  %v1066 = vpop.f32.mrb[0].mxu0
  %v1067 = vadd.f32 %v1000, %v1066
  %v1068 = vpop.f32.mrb[0].mxu0
  %1069 = vdwg.mxu0
  %v1070 = vld [vmem:[%s7] sm:$0xf]
  %v1071 = vld [vmem:[%s7 + $0x4] sm:$0xf]
  %v1072 = vld [vmem:[%s8] sm:$0xf]
  %v1073 = vld [vmem:[%s8 + $0x4] sm:$0xf]
  %v1074 = vld [vmem:[%s8 + $0x8] sm:$0xf]
  %v1075 = vld [vmem:[%s8 + $0xc] sm:$0xf]
  %v1076 = vld [vmem:[%s9] sm:$0x1]
  %v1077 = vlaneseq
  %v1078 = vand.u32 %v1077, 127
  %v1081 = vunpack.c.l.b16 %v1070
  %v1082 = vunpack.c.l.b16 %v1071
  %v1083 = vpack.c.b16 %v1082, %v1081
  %vm1085 = vcmask 130048
  %v1086 = vsel %vm1085, 0, 0
  %1088 = vmatprep.subr.bf16.mxu0 0
  %1089 = vmatpush1.bf16.msra.mxu0 %v1083
  %1090 = vmatprep.subr.bf16.mxu0 0
  %1091 = vmatpush1.bf16.msra.mxu0 0
  %1092 = vmatprep.subr.bf16.mxu0 0
  %1093 = vmatpush1.bf16.msra.mxu0 0
  %1094 = vmatprep.subr.bf16.mxu0 0
  %1095 = vmatpush1.bf16.msra.mxu0 0
  %1096 = vmatprep.subr.bf16.mxu0 0
  %1097 = vmatpush1.bf16.msra.mxu0 0
  %1098 = vmatprep.subr.bf16.mxu0 0
  %1099 = vmatpush1.bf16.msra.mxu0 0
  %1100 = vmatprep.subr.bf16.mxu0 0
  %1101 = vmatpush1.bf16.msra.mxu0 0
  %1102 = vmatprep.subr.bf16.mxu0 0
  %1103 = vmatpush1.bf16.msra.mxu0 0
  %1104 = vmatprep.subr.bf16.mxu0 0
  %1105 = vmatpush1.bf16.msra.mxu0 0
  %1106 = vmatprep.subr.bf16.mxu0 0
  %1107 = vmatpush1.bf16.msra.mxu0 0
  %1108 = vmatprep.subr.bf16.mxu0 0
  %1109 = vmatpush1.bf16.msra.mxu0 0
  %1110 = vmatprep.subr.bf16.mxu0 0
  %1111 = vmatpush1.bf16.msra.mxu0 0
  %1112 = vmatprep.subr.bf16.mxu0 0
  %1113 = vmatpush1.bf16.msra.mxu0 0
  %1114 = vmatprep.subr.bf16.mxu0 0
  %1115 = vmatpush1.bf16.msra.mxu0 0
  %1116 = vmatprep.subr.bf16.mxu0 0
  %1117 = vmatpush1.bf16.msra.mxu0 0
  %1118 = vmatprep.subr.bf16.mxu0 0
  %1119 = vmatpush1.bf16.msra.mxu0 0
  %1120 = vmatprep.mubr.bf16.mxu0 0
  %1121 = vmatmul.mubr.bf16.gmra.mrb[0].mxu0 %v1086
  %v1122 = vpop.f32.mrb[0].mxu0
  %v1123 = vadd.f32 0.0, %v1122
  %v1124 = vpop.f32.mrb[0].mxu0
  %v1125 = vpop.f32.mrb[0].mxu0
  %v1126 = vpop.f32.mrb[0].mxu0
  %1127 = vdwg.mxu0
  %v1128 = vadd.f32 %v1064, %v1123
  %v1129 = vtanh.pop %v1128
  %v1130 = vpack.c.bf16 %v1129, %v1129
  %v1132 = vlaneseq
  %v1133 = vshrl.u32 %v1132, 7
  %v1134 = vsub.s32 0, %v1133
  %v1135 = vrot.slane %v1076, %v1134
  %v1141 = vunpack.c.l.b16 %v1072
  %v1142 = vunpack.c.l.b16 %v1073
  %v1143 = vunpack.c.l.b16 %v1074
  %v1144 = vunpack.c.l.b16 %v1075
  %v1145 = vpack.c.b16 %v1142, %v1141
  %v1146 = vpack.c.b16 %v1144, %v1143
  %v1150 = vsel %vm981, %v1130, 0
  %1152 = vmatprep.subr.bf16.mxu0 0
  %1153 = vmatpush1.bf16.msra.mxu0 %v1145
  %1154 = vmatprep.subr.bf16.mxu0 0
  %1155 = vmatpush1.bf16.msra.mxu0 %v1146
  %1156 = vmatprep.subr.bf16.mxu0 0
  %1157 = vmatpush1.bf16.msra.mxu0 0
  %1158 = vmatprep.subr.bf16.mxu0 0
  %1159 = vmatpush1.bf16.msra.mxu0 0
  %1160 = vmatprep.subr.bf16.mxu0 0
  %1161 = vmatpush1.bf16.msra.mxu0 0
  %1162 = vmatprep.subr.bf16.mxu0 0
  %1163 = vmatpush1.bf16.msra.mxu0 0
  %1164 = vmatprep.subr.bf16.mxu0 0
  %1165 = vmatpush1.bf16.msra.mxu0 0
  %1166 = vmatprep.subr.bf16.mxu0 0
  %1167 = vmatpush1.bf16.msra.mxu0 0
  %1168 = vmatprep.subr.bf16.mxu0 0
  %1169 = vmatpush1.bf16.msra.mxu0 0
  %1170 = vmatprep.subr.bf16.mxu0 0
  %1171 = vmatpush1.bf16.msra.mxu0 0
  %1172 = vmatprep.subr.bf16.mxu0 0
  %1173 = vmatpush1.bf16.msra.mxu0 0
  %1174 = vmatprep.subr.bf16.mxu0 0
  %1175 = vmatpush1.bf16.msra.mxu0 0
  %1176 = vmatprep.subr.bf16.mxu0 0
  %1177 = vmatpush1.bf16.msra.mxu0 0
  %1178 = vmatprep.subr.bf16.mxu0 0
  %1179 = vmatpush1.bf16.msra.mxu0 0
  %1180 = vmatprep.subr.bf16.mxu0 0
  %1181 = vmatpush1.bf16.msra.mxu0 0
  %1182 = vmatprep.subr.bf16.mxu0 0
  %1183 = vmatpush1.bf16.msra.mxu0 0
  %1184 = vmatprep.mubr.bf16.mxu0 0
  %1185 = vmatmul.mubr.bf16.gmra.mrb[0].mxu0 %v1150
  %v1186 = vpop.f32.mrb[0].mxu0
  %v1187 = vadd.f32 %v1135, %v1186
  %v1188 = vpop.f32.mrb[0].mxu0
  %v1189 = vpop.f32.mrb[0].mxu0
  %v1190 = vpop.f32.mrb[0].mxu0
  %1191 = vdwg.mxu0
  %vm1192 = vcmask 123904
  %v1193 = vsel %vm1192, %v1187, -inf
  %1194 = vmax.xlane.f32.xlu0 %v1193
  %v1195 = vpop.xlane.xlu0 %1194
  %vm1196 = vcmp.eq.f32.partialorder %v1187, %v1195
  %v1197 = vsel %vm1196, %v1078, 16
  %v1198 = vsel %vm1192, %v1197, 2147483647
  %v1199 = vand.u32 %v1198, 65535
  %v1200 = vshra.s32 %v1198, 16
  %v1201 = vcvt.s32.f32 %v1199
  %v1202 = vcvt.s32.f32 %v1200
  %1203 = vmin.xlane.f32.xlu0 %v1202
  %v1204 = vpop.xlane.xlu0 %1203
  %vm1205 = vcmp.eq.f32.partialorder %v1202, %v1204
  %v1206 = vsel %vm1205, %v1201, inf
  %1207 = vmin.xlane.f32.xlu0 %v1206
  %v1208 = vpop.xlane.xlu0 %1207
  %v1209 = vcvt.f32.s32 %v1208
  %v1210 = vcvt.f32.s32 %v1204
  %v1211 = vshll.u32 %v1210, 16
  %v1212 = vadd.s32 %v1211, %v1209
  %vm1213 = vcmp.eq.s32.totalorder %v1078, %v1212
  %v1214 = vsel %vm1213, 1, 0
  %v1215 = vcvt.s32.f32 %v1214
  %v1216 = vpack.c.bf16 %v1215, %v1215
  %v1218 = vsel %vm1085, %v1216, 0
  %1220 = vmatprep.subr.bf16.mxu0 0
  %1221 = vmatpush1.bf16.msra.mxu0 %v1083
  %1222 = vmatprep.subr.bf16.mxu0 0
  %1223 = vmatpush1.bf16.msra.mxu0 0
  %1224 = vmatprep.subr.bf16.mxu0 0
  %1225 = vmatpush1.bf16.msra.mxu0 0
  %1226 = vmatprep.subr.bf16.mxu0 0
  %1227 = vmatpush1.bf16.msra.mxu0 0
  %1228 = vmatprep.subr.bf16.mxu0 0
  %1229 = vmatpush1.bf16.msra.mxu0 0
  %1230 = vmatprep.subr.bf16.mxu0 0
  %1231 = vmatpush1.bf16.msra.mxu0 0
  %1232 = vmatprep.subr.bf16.mxu0 0
  %1233 = vmatpush1.bf16.msra.mxu0 0
  %1234 = vmatprep.subr.bf16.mxu0 0
  %1235 = vmatpush1.bf16.msra.mxu0 0
  %1236 = vmatprep.subr.bf16.mxu0 0
  %1237 = vmatpush1.bf16.msra.mxu0 0
  %1238 = vmatprep.subr.bf16.mxu0 0
  %1239 = vmatpush1.bf16.msra.mxu0 0
  %1240 = vmatprep.subr.bf16.mxu0 0
  %1241 = vmatpush1.bf16.msra.mxu0 0
  %1242 = vmatprep.subr.bf16.mxu0 0
  %1243 = vmatpush1.bf16.msra.mxu0 0
  %1244 = vmatprep.subr.bf16.mxu0 0
  %1245 = vmatpush1.bf16.msra.mxu0 0
  %1246 = vmatprep.subr.bf16.mxu0 0
  %1247 = vmatpush1.bf16.msra.mxu0 0
  %1248 = vmatprep.subr.bf16.mxu0 0
  %1249 = vmatpush1.bf16.msra.mxu0 0
  %1250 = vmatprep.subr.bf16.mxu0 0
  %1251 = vmatpush1.bf16.msra.mxu0 0
  %1252 = vmatprep.mubr.bf16.mxu0 0
  %1253 = vmatmul.mubr.bf16.gmra.mrb[0].mxu0 %v1218
  %v1254 = vpop.f32.mrb[0].mxu0
  %v1255 = vadd.f32 0.0, %v1254
  %v1256 = vpop.f32.mrb[0].mxu0
  %v1257 = vpop.f32.mrb[0].mxu0
  %v1258 = vpop.f32.mrb[0].mxu0
  %1259 = vdwg.mxu0
  %v1261 = vrot.slane %v1255, 6
  %v1263 = vadd.f32 %v1064, %v1261
  %v1264 = vtanh.pop %v1263
  %v1265 = vpack.c.bf16 %v1264, %v1264
  %v1267 = vrot.slane %v1265, 1
  %v1269 = vsel %vm981, %v1267, 0
  %1271 = vmatprep.subr.bf16.mxu0 0
  %1272 = vmatpush1.bf16.msra.mxu0 %v1145
  %1273 = vmatprep.subr.bf16.mxu0 0
  %1274 = vmatpush1.bf16.msra.mxu0 %v1146
  %1275 = vmatprep.subr.bf16.mxu0 0
  %1276 = vmatpush1.bf16.msra.mxu0 0
  %1277 = vmatprep.subr.bf16.mxu0 0
  %1278 = vmatpush1.bf16.msra.mxu0 0
  %1279 = vmatprep.subr.bf16.mxu0 0
  %1280 = vmatpush1.bf16.msra.mxu0 0
  %1281 = vmatprep.subr.bf16.mxu0 0
  %1282 = vmatpush1.bf16.msra.mxu0 0
  %1283 = vmatprep.subr.bf16.mxu0 0
  %1284 = vmatpush1.bf16.msra.mxu0 0
  %1285 = vmatprep.subr.bf16.mxu0 0
  %1286 = vmatpush1.bf16.msra.mxu0 0
  %1287 = vmatprep.subr.bf16.mxu0 0
  %1288 = vmatpush1.bf16.msra.mxu0 0
  %1289 = vmatprep.subr.bf16.mxu0 0
  %1290 = vmatpush1.bf16.msra.mxu0 0
  %1291 = vmatprep.subr.bf16.mxu0 0
  %1292 = vmatpush1.bf16.msra.mxu0 0
  %1293 = vmatprep.subr.bf16.mxu0 0
  %1294 = vmatpush1.bf16.msra.mxu0 0
  %1295 = vmatprep.subr.bf16.mxu0 0
  %1296 = vmatpush1.bf16.msra.mxu0 0
  %1297 = vmatprep.subr.bf16.mxu0 0
  %1298 = vmatpush1.bf16.msra.mxu0 0
  %1299 = vmatprep.subr.bf16.mxu0 0
  %1300 = vmatpush1.bf16.msra.mxu0 0
  %1301 = vmatprep.subr.bf16.mxu0 0
  %1302 = vmatpush1.bf16.msra.mxu0 0
  %1303 = vmatprep.mubr.bf16.mxu0 0
  %1304 = vmatmul.mubr.bf16.gmra.mrb[0].mxu0 %v1269
  %v1305 = vpop.f32.mrb[0].mxu0
  %v1306 = vadd.f32 %v1135, %v1305
  %v1307 = vpop.f32.mrb[0].mxu0
  %v1308 = vpop.f32.mrb[0].mxu0
  %v1309 = vpop.f32.mrb[0].mxu0
  %1310 = vdwg.mxu0
  %v1311 = vsel %vm1192, %v1306, -inf
  %1312 = vmax.xlane.f32.xlu0 %v1311
  %v1313 = vpop.xlane.xlu0 %1312
  %vm1314 = vcmp.eq.f32.partialorder %v1306, %v1313
  %v1315 = vsel %vm1314, %v1078, 16
  %v1316 = vsel %vm1192, %v1315, 2147483647
  %v1317 = vand.u32 %v1316, 65535
  %v1318 = vshra.s32 %v1316, 16
  %v1319 = vcvt.s32.f32 %v1317
  %v1320 = vcvt.s32.f32 %v1318
  %1321 = vmin.xlane.f32.xlu0 %v1320
  %v1322 = vpop.xlane.xlu0 %1321
  %vm1323 = vcmp.eq.f32.partialorder %v1320, %v1322
  %v1324 = vsel %vm1323, %v1319, inf
  %1325 = vmin.xlane.f32.xlu0 %v1324
  %v1326 = vpop.xlane.xlu0 %1325
  %v1327 = vcvt.f32.s32 %v1326
  %v1328 = vcvt.f32.s32 %v1322
  %v1329 = vshll.u32 %v1328, 16
  %v1330 = vadd.s32 %v1329, %v1327
  %vm1331 = vcmp.eq.s32.totalorder %v1078, %v1330
  %v1332 = vsel %vm1331, 1, 0
  %v1333 = vcvt.s32.f32 %v1332
  %v1334 = vpack.c.bf16 %v1333, %v1333
  %v1336 = vsel %vm1085, %v1334, 0
  %1338 = vmatprep.subr.bf16.mxu0 0
  %1339 = vmatpush1.bf16.msra.mxu0 %v1083
  %1340 = vmatprep.subr.bf16.mxu0 0
  %1341 = vmatpush1.bf16.msra.mxu0 0
  %1342 = vmatprep.subr.bf16.mxu0 0
  %1343 = vmatpush1.bf16.msra.mxu0 0
  %1344 = vmatprep.subr.bf16.mxu0 0
  %1345 = vmatpush1.bf16.msra.mxu0 0
  %1346 = vmatprep.subr.bf16.mxu0 0
  %1347 = vmatpush1.bf16.msra.mxu0 0
  %1348 = vmatprep.subr.bf16.mxu0 0
  %1349 = vmatpush1.bf16.msra.mxu0 0
  %1350 = vmatprep.subr.bf16.mxu0 0
  %1351 = vmatpush1.bf16.msra.mxu0 0
  %1352 = vmatprep.subr.bf16.mxu0 0
  %1353 = vmatpush1.bf16.msra.mxu0 0
  %1354 = vmatprep.subr.bf16.mxu0 0
  %1355 = vmatpush1.bf16.msra.mxu0 0
  %1356 = vmatprep.subr.bf16.mxu0 0
  %1357 = vmatpush1.bf16.msra.mxu0 0
  %1358 = vmatprep.subr.bf16.mxu0 0
  %1359 = vmatpush1.bf16.msra.mxu0 0
  %1360 = vmatprep.subr.bf16.mxu0 0
  %1361 = vmatpush1.bf16.msra.mxu0 0
  %1362 = vmatprep.subr.bf16.mxu0 0
  %1363 = vmatpush1.bf16.msra.mxu0 0
  %1364 = vmatprep.subr.bf16.mxu0 0
  %1365 = vmatpush1.bf16.msra.mxu0 0
  %1366 = vmatprep.subr.bf16.mxu0 0
  %1367 = vmatpush1.bf16.msra.mxu0 0
  %1368 = vmatprep.subr.bf16.mxu0 0
  %1369 = vmatpush1.bf16.msra.mxu0 0
  %1370 = vmatprep.mubr.bf16.mxu0 0
  %1371 = vmatmul.mubr.bf16.gmra.mrb[0].mxu0 %v1336
  %v1372 = vpop.f32.mrb[0].mxu0
  %v1373 = vadd.f32 0.0, %v1372
  %v1374 = vpop.f32.mrb[0].mxu0
  %v1375 = vpop.f32.mrb[0].mxu0
  %v1376 = vpop.f32.mrb[0].mxu0
  %1377 = vdwg.mxu0
  %v1379 = vrot.slane %v1373, 4
  %v1381 = vadd.f32 %v1064, %v1379
  %v1382 = vtanh.pop %v1381
  %v1383 = vpack.c.bf16 %v1382, %v1382
  %v1385 = vrot.slane %v1383, 2
  %v1387 = vsel %vm981, %v1385, 0
  %1389 = vmatprep.subr.bf16.mxu0 0
  %1390 = vmatpush1.bf16.msra.mxu0 %v1145
  %1391 = vmatprep.subr.bf16.mxu0 0
  %1392 = vmatpush1.bf16.msra.mxu0 %v1146
  %1393 = vmatprep.subr.bf16.mxu0 0
  %1394 = vmatpush1.bf16.msra.mxu0 0
  %1395 = vmatprep.subr.bf16.mxu0 0
  %1396 = vmatpush1.bf16.msra.mxu0 0
  %1397 = vmatprep.subr.bf16.mxu0 0
  %1398 = vmatpush1.bf16.msra.mxu0 0
  %1399 = vmatprep.subr.bf16.mxu0 0
  %1400 = vmatpush1.bf16.msra.mxu0 0
  %1401 = vmatprep.subr.bf16.mxu0 0
  %1402 = vmatpush1.bf16.msra.mxu0 0
  %1403 = vmatprep.subr.bf16.mxu0 0
  %1404 = vmatpush1.bf16.msra.mxu0 0
  %1405 = vmatprep.subr.bf16.mxu0 0
  %1406 = vmatpush1.bf16.msra.mxu0 0
  %1407 = vmatprep.subr.bf16.mxu0 0
  %1408 = vmatpush1.bf16.msra.mxu0 0
  %1409 = vmatprep.subr.bf16.mxu0 0
  %1410 = vmatpush1.bf16.msra.mxu0 0
  %1411 = vmatprep.subr.bf16.mxu0 0
  %1412 = vmatpush1.bf16.msra.mxu0 0
  %1413 = vmatprep.subr.bf16.mxu0 0
  %1414 = vmatpush1.bf16.msra.mxu0 0
  %1415 = vmatprep.subr.bf16.mxu0 0
  %1416 = vmatpush1.bf16.msra.mxu0 0
  %1417 = vmatprep.subr.bf16.mxu0 0
  %1418 = vmatpush1.bf16.msra.mxu0 0
  %1419 = vmatprep.subr.bf16.mxu0 0
  %1420 = vmatpush1.bf16.msra.mxu0 0
  %1421 = vmatprep.mubr.bf16.mxu0 0
  %1422 = vmatmul.mubr.bf16.gmra.mrb[0].mxu0 %v1387
  %v1423 = vpop.f32.mrb[0].mxu0
  %v1424 = vadd.f32 %v1135, %v1423
  %v1425 = vpop.f32.mrb[0].mxu0
  %v1426 = vpop.f32.mrb[0].mxu0
  %v1427 = vpop.f32.mrb[0].mxu0
  %1428 = vdwg.mxu0
  %v1429 = vsel %vm1192, %v1424, -inf
  %1430 = vmax.xlane.f32.xlu0 %v1429
  %v1431 = vpop.xlane.xlu0 %1430
  %vm1432 = vcmp.eq.f32.partialorder %v1424, %v1431
  %v1433 = vsel %vm1432, %v1078, 16
  %v1434 = vsel %vm1192, %v1433, 2147483647
  %v1435 = vand.u32 %v1434, 65535
  %v1436 = vshra.s32 %v1434, 16
  %v1437 = vcvt.s32.f32 %v1435
  %v1438 = vcvt.s32.f32 %v1436
  %1439 = vmin.xlane.f32.xlu0 %v1438
  %v1440 = vpop.xlane.xlu0 %1439
  %vm1441 = vcmp.eq.f32.partialorder %v1438, %v1440
  %v1442 = vsel %vm1441, %v1437, inf
  %1443 = vmin.xlane.f32.xlu0 %v1442
  %v1444 = vpop.xlane.xlu0 %1443
  %v1445 = vcvt.f32.s32 %v1444
  %v1446 = vcvt.f32.s32 %v1440
  %v1447 = vshll.u32 %v1446, 16
  %v1448 = vadd.s32 %v1447, %v1445
  %vm1449 = vcmp.eq.s32.totalorder %v1078, %v1448
  %v1450 = vsel %vm1449, 1, 0
  %v1451 = vcvt.s32.f32 %v1450
  %v1452 = vpack.c.bf16 %v1451, %v1451
  %v1454 = vsel %vm1085, %v1452, 0
  %1456 = vmatprep.subr.bf16.mxu0 0
  %1457 = vmatpush1.bf16.msra.mxu0 %v1083
  %1458 = vmatprep.subr.bf16.mxu0 0
  %1459 = vmatpush1.bf16.msra.mxu0 0
  %1460 = vmatprep.subr.bf16.mxu0 0
  %1461 = vmatpush1.bf16.msra.mxu0 0
  %1462 = vmatprep.subr.bf16.mxu0 0
  %1463 = vmatpush1.bf16.msra.mxu0 0
  %1464 = vmatprep.subr.bf16.mxu0 0
  %1465 = vmatpush1.bf16.msra.mxu0 0
  %1466 = vmatprep.subr.bf16.mxu0 0
  %1467 = vmatpush1.bf16.msra.mxu0 0
  %1468 = vmatprep.subr.bf16.mxu0 0
  %1469 = vmatpush1.bf16.msra.mxu0 0
  %1470 = vmatprep.subr.bf16.mxu0 0
  %1471 = vmatpush1.bf16.msra.mxu0 0
  %1472 = vmatprep.subr.bf16.mxu0 0
  %1473 = vmatpush1.bf16.msra.mxu0 0
  %1474 = vmatprep.subr.bf16.mxu0 0
  %1475 = vmatpush1.bf16.msra.mxu0 0
  %1476 = vmatprep.subr.bf16.mxu0 0
  %1477 = vmatpush1.bf16.msra.mxu0 0
  %1478 = vmatprep.subr.bf16.mxu0 0
  %1479 = vmatpush1.bf16.msra.mxu0 0
  %1480 = vmatprep.subr.bf16.mxu0 0
  %1481 = vmatpush1.bf16.msra.mxu0 0
  %1482 = vmatprep.subr.bf16.mxu0 0
  %1483 = vmatpush1.bf16.msra.mxu0 0
  %1484 = vmatprep.subr.bf16.mxu0 0
  %1485 = vmatpush1.bf16.msra.mxu0 0
  %1486 = vmatprep.subr.bf16.mxu0 0
  %1487 = vmatpush1.bf16.msra.mxu0 0
  %1488 = vmatprep.mubr.bf16.mxu0 0
  %1489 = vmatmul.mubr.bf16.gmra.mrb[0].mxu0 %v1454
  %v1490 = vpop.f32.mrb[0].mxu0
  %v1491 = vadd.f32 0.0, %v1490
  %v1492 = vpop.f32.mrb[0].mxu0
  %v1493 = vpop.f32.mrb[0].mxu0
  %v1494 = vpop.f32.mrb[0].mxu0
  %1495 = vdwg.mxu0
  %v1497 = vrot.slane %v1491, 2
  %v1499 = vadd.f32 %v1064, %v1497
  %v1500 = vtanh.pop %v1499
  %v1501 = vpack.c.bf16 %v1500, %v1500
  %v1503 = vrot.slane %v1501, 3
  %v1505 = vsel %vm981, %v1503, 0
  %1507 = vmatprep.subr.bf16.mxu0 0
  %1508 = vmatpush1.bf16.msra.mxu0 %v1145
  %1509 = vmatprep.subr.bf16.mxu0 0
  %1510 = vmatpush1.bf16.msra.mxu0 %v1146
  %1511 = vmatprep.subr.bf16.mxu0 0
  %1512 = vmatpush1.bf16.msra.mxu0 0
  %1513 = vmatprep.subr.bf16.mxu0 0
  %1514 = vmatpush1.bf16.msra.mxu0 0
  %1515 = vmatprep.subr.bf16.mxu0 0
  %1516 = vmatpush1.bf16.msra.mxu0 0
  %1517 = vmatprep.subr.bf16.mxu0 0
  %1518 = vmatpush1.bf16.msra.mxu0 0
  %1519 = vmatprep.subr.bf16.mxu0 0
  %1520 = vmatpush1.bf16.msra.mxu0 0
  %1521 = vmatprep.subr.bf16.mxu0 0
  %1522 = vmatpush1.bf16.msra.mxu0 0
  %1523 = vmatprep.subr.bf16.mxu0 0
  %1524 = vmatpush1.bf16.msra.mxu0 0
  %1525 = vmatprep.subr.bf16.mxu0 0
  %1526 = vmatpush1.bf16.msra.mxu0 0
  %1527 = vmatprep.subr.bf16.mxu0 0
  %1528 = vmatpush1.bf16.msra.mxu0 0
  %1529 = vmatprep.subr.bf16.mxu0 0
  %1530 = vmatpush1.bf16.msra.mxu0 0
  %1531 = vmatprep.subr.bf16.mxu0 0
  %1532 = vmatpush1.bf16.msra.mxu0 0
  %1533 = vmatprep.subr.bf16.mxu0 0
  %1534 = vmatpush1.bf16.msra.mxu0 0
  %1535 = vmatprep.subr.bf16.mxu0 0
  %1536 = vmatpush1.bf16.msra.mxu0 0
  %1537 = vmatprep.subr.bf16.mxu0 0
  %1538 = vmatpush1.bf16.msra.mxu0 0
  %1539 = vmatprep.mubr.bf16.mxu0 0
  %1540 = vmatmul.mubr.bf16.gmra.mrb[0].mxu0 %v1505
  %v1541 = vpop.f32.mrb[0].mxu0
  %v1542 = vadd.f32 %v1135, %v1541
  %v1543 = vpop.f32.mrb[0].mxu0
  %v1544 = vpop.f32.mrb[0].mxu0
  %v1545 = vpop.f32.mrb[0].mxu0
  %1546 = vdwg.mxu0
  %v1547 = vsel %vm1192, %v1542, -inf
  %1548 = vmax.xlane.f32.xlu0 %v1547
  %v1549 = vpop.xlane.xlu0 %1548
  %vm1550 = vcmp.eq.f32.partialorder %v1542, %v1549
  %v1551 = vsel %vm1550, %v1078, 16
  %v1552 = vsel %vm1192, %v1551, 2147483647
  %v1553 = vand.u32 %v1552, 65535
  %v1554 = vshra.s32 %v1552, 16
  %v1555 = vcvt.s32.f32 %v1553
  %v1556 = vcvt.s32.f32 %v1554
  %1557 = vmin.xlane.f32.xlu0 %v1556
  %v1558 = vpop.xlane.xlu0 %1557
  %vm1559 = vcmp.eq.f32.partialorder %v1556, %v1558
  %v1560 = vsel %vm1559, %v1555, inf
  %1561 = vmin.xlane.f32.xlu0 %v1560
  %v1562 = vpop.xlane.xlu0 %1561
  %v1563 = vcvt.f32.s32 %v1562
  %v1564 = vcvt.f32.s32 %v1558
  %v1565 = vshll.u32 %v1564, 16
  %v1566 = vadd.s32 %v1565, %v1563
  %vm1567 = vcmp.eq.s32.totalorder %v1078, %v1566
  %v1568 = vsel %vm1567, 1, 0
  %v1569 = vcvt.s32.f32 %v1568
  %v1570 = vpack.c.bf16 %v1569, %v1569
  %v1572 = vsel %vm1085, %v1570, 0
  %1574 = vmatprep.subr.bf16.mxu0 0
  %1575 = vmatpush1.bf16.msra.mxu0 %v1083
  %1576 = vmatprep.subr.bf16.mxu0 0
  %1577 = vmatpush1.bf16.msra.mxu0 0
  %1578 = vmatprep.subr.bf16.mxu0 0
  %1579 = vmatpush1.bf16.msra.mxu0 0
  %1580 = vmatprep.subr.bf16.mxu0 0
  %1581 = vmatpush1.bf16.msra.mxu0 0
  %1582 = vmatprep.subr.bf16.mxu0 0
  %1583 = vmatpush1.bf16.msra.mxu0 0
  %1584 = vmatprep.subr.bf16.mxu0 0
  %1585 = vmatpush1.bf16.msra.mxu0 0
  %1586 = vmatprep.subr.bf16.mxu0 0
  %1587 = vmatpush1.bf16.msra.mxu0 0
  %1588 = vmatprep.subr.bf16.mxu0 0
  %1589 = vmatpush1.bf16.msra.mxu0 0
  %1590 = vmatprep.subr.bf16.mxu0 0
  %1591 = vmatpush1.bf16.msra.mxu0 0
  %1592 = vmatprep.subr.bf16.mxu0 0
  %1593 = vmatpush1.bf16.msra.mxu0 0
  %1594 = vmatprep.subr.bf16.mxu0 0
  %1595 = vmatpush1.bf16.msra.mxu0 0
  %1596 = vmatprep.subr.bf16.mxu0 0
  %1597 = vmatpush1.bf16.msra.mxu0 0
  %1598 = vmatprep.subr.bf16.mxu0 0
  %1599 = vmatpush1.bf16.msra.mxu0 0
  %1600 = vmatprep.subr.bf16.mxu0 0
  %1601 = vmatpush1.bf16.msra.mxu0 0
  %1602 = vmatprep.subr.bf16.mxu0 0
  %1603 = vmatpush1.bf16.msra.mxu0 0
  %1604 = vmatprep.subr.bf16.mxu0 0
  %1605 = vmatpush1.bf16.msra.mxu0 0
  %1606 = vmatprep.mubr.bf16.mxu0 0
  %1607 = vmatmul.mubr.bf16.gmra.mrb[0].mxu0 %v1572
  %v1608 = vpop.f32.mrb[0].mxu0
  %v1609 = vadd.f32 0.0, %v1608
  %v1610 = vpop.f32.mrb[0].mxu0
  %v1611 = vpop.f32.mrb[0].mxu0
  %v1612 = vpop.f32.mrb[0].mxu0
  %1613 = vdwg.mxu0
  %v1614 = vadd.f32 %v1067, %v1609
  %v1615 = vtanh.pop %v1614
  %v1616 = vpack.c.bf16 %v1615, %v1615
  %v1618 = vsel %vm981, %v1616, 0
  %1620 = vmatprep.subr.bf16.mxu0 0
  %1621 = vmatpush1.bf16.msra.mxu0 %v1145
  %1622 = vmatprep.subr.bf16.mxu0 0
  %1623 = vmatpush1.bf16.msra.mxu0 %v1146
  %1624 = vmatprep.subr.bf16.mxu0 0
  %1625 = vmatpush1.bf16.msra.mxu0 0
  %1626 = vmatprep.subr.bf16.mxu0 0
  %1627 = vmatpush1.bf16.msra.mxu0 0
  %1628 = vmatprep.subr.bf16.mxu0 0
  %1629 = vmatpush1.bf16.msra.mxu0 0
  %1630 = vmatprep.subr.bf16.mxu0 0
  %1631 = vmatpush1.bf16.msra.mxu0 0
  %1632 = vmatprep.subr.bf16.mxu0 0
  %1633 = vmatpush1.bf16.msra.mxu0 0
  %1634 = vmatprep.subr.bf16.mxu0 0
  %1635 = vmatpush1.bf16.msra.mxu0 0
  %1636 = vmatprep.subr.bf16.mxu0 0
  %1637 = vmatpush1.bf16.msra.mxu0 0
  %1638 = vmatprep.subr.bf16.mxu0 0
  %1639 = vmatpush1.bf16.msra.mxu0 0
  %1640 = vmatprep.subr.bf16.mxu0 0
  %1641 = vmatpush1.bf16.msra.mxu0 0
  %1642 = vmatprep.subr.bf16.mxu0 0
  %1643 = vmatpush1.bf16.msra.mxu0 0
  %1644 = vmatprep.subr.bf16.mxu0 0
  %1645 = vmatpush1.bf16.msra.mxu0 0
  %1646 = vmatprep.subr.bf16.mxu0 0
  %1647 = vmatpush1.bf16.msra.mxu0 0
  %1648 = vmatprep.subr.bf16.mxu0 0
  %1649 = vmatpush1.bf16.msra.mxu0 0
  %1650 = vmatprep.subr.bf16.mxu0 0
  %1651 = vmatpush1.bf16.msra.mxu0 0
  %1652 = vmatprep.mubr.bf16.mxu0 0
  %1653 = vmatmul.mubr.bf16.gmra.mrb[0].mxu0 %v1618
  %v1654 = vpop.f32.mrb[0].mxu0
  %v1655 = vadd.f32 %v1135, %v1654
  %v1656 = vpop.f32.mrb[0].mxu0
  %v1657 = vpop.f32.mrb[0].mxu0
  %v1658 = vpop.f32.mrb[0].mxu0
  %1659 = vdwg.mxu0
  %v1660 = vsel %vm1192, %v1655, -inf
  %1661 = vmax.xlane.f32.xlu0 %v1660
  %v1662 = vpop.xlane.xlu0 %1661
  %vm1663 = vcmp.eq.f32.partialorder %v1655, %v1662
  %v1664 = vsel %vm1663, %v1078, 16
  %v1665 = vsel %vm1192, %v1664, 2147483647
  %v1666 = vand.u32 %v1665, 65535
  %v1667 = vshra.s32 %v1665, 16
  %v1668 = vcvt.s32.f32 %v1666
  %v1669 = vcvt.s32.f32 %v1667
  %1670 = vmin.xlane.f32.xlu0 %v1669
  %v1671 = vpop.xlane.xlu0 %1670
  %vm1672 = vcmp.eq.f32.partialorder %v1669, %v1671
  %v1673 = vsel %vm1672, %v1668, inf
  %1674 = vmin.xlane.f32.xlu0 %v1673
  %v1675 = vpop.xlane.xlu0 %1674
  %v1676 = vcvt.f32.s32 %v1675
  %v1677 = vcvt.f32.s32 %v1671
  %v1678 = vshll.u32 %v1677, 16
  %v1679 = vadd.s32 %v1678, %v1676
  %vm1680 = vcmp.eq.s32.totalorder %v1078, %v1679
  %v1681 = vsel %vm1680, 1, 0
  %v1682 = vcvt.s32.f32 %v1681
  %v1683 = vpack.c.bf16 %v1682, %v1682
  %v1685 = vsel %vm1085, %v1683, 0
  %1687 = vmatprep.subr.bf16.mxu0 0
  %1688 = vmatpush1.bf16.msra.mxu0 %v1083
  %1689 = vmatprep.subr.bf16.mxu0 0
  %1690 = vmatpush1.bf16.msra.mxu0 0
  %1691 = vmatprep.subr.bf16.mxu0 0
  %1692 = vmatpush1.bf16.msra.mxu0 0
  %1693 = vmatprep.subr.bf16.mxu0 0
  %1694 = vmatpush1.bf16.msra.mxu0 0
  %1695 = vmatprep.subr.bf16.mxu0 0
  %1696 = vmatpush1.bf16.msra.mxu0 0
  %1697 = vmatprep.subr.bf16.mxu0 0
  %1698 = vmatpush1.bf16.msra.mxu0 0
  %1699 = vmatprep.subr.bf16.mxu0 0
  %1700 = vmatpush1.bf16.msra.mxu0 0
  %1701 = vmatprep.subr.bf16.mxu0 0
  %1702 = vmatpush1.bf16.msra.mxu0 0
  %1703 = vmatprep.subr.bf16.mxu0 0
  %1704 = vmatpush1.bf16.msra.mxu0 0
  %1705 = vmatprep.subr.bf16.mxu0 0
  %1706 = vmatpush1.bf16.msra.mxu0 0
  %1707 = vmatprep.subr.bf16.mxu0 0
  %1708 = vmatpush1.bf16.msra.mxu0 0
  %1709 = vmatprep.subr.bf16.mxu0 0
  %1710 = vmatpush1.bf16.msra.mxu0 0
  %1711 = vmatprep.subr.bf16.mxu0 0
  %1712 = vmatpush1.bf16.msra.mxu0 0
  %1713 = vmatprep.subr.bf16.mxu0 0
  %1714 = vmatpush1.bf16.msra.mxu0 0
  %1715 = vmatprep.subr.bf16.mxu0 0
  %1716 = vmatpush1.bf16.msra.mxu0 0
  %1717 = vmatprep.subr.bf16.mxu0 0
  %1718 = vmatpush1.bf16.msra.mxu0 0
  %1719 = vmatprep.mubr.bf16.mxu0 0
  %1720 = vmatmul.mubr.bf16.gmra.mrb[0].mxu0 %v1685
  %v1721 = vpop.f32.mrb[0].mxu0
  %v1722 = vadd.f32 0.0, %v1721
  %v1723 = vpop.f32.mrb[0].mxu0
  %v1724 = vpop.f32.mrb[0].mxu0
  %v1725 = vpop.f32.mrb[0].mxu0
  %1726 = vdwg.mxu0
  %v1728 = vrot.slane %v1722, 6
  %v1730 = vadd.f32 %v1067, %v1728
  %v1731 = vtanh.pop %v1730
  %v1732 = vpack.c.bf16 %v1731, %v1731
  %v1734 = vrot.slane %v1732, 1
  %v1736 = vsel %vm981, %v1734, 0
  %1738 = vmatprep.subr.bf16.mxu0 0
  %1739 = vmatpush1.bf16.msra.mxu0 %v1145
  %1740 = vmatprep.subr.bf16.mxu0 0
  %1741 = vmatpush1.bf16.msra.mxu0 %v1146
  %1742 = vmatprep.subr.bf16.mxu0 0
  %1743 = vmatpush1.bf16.msra.mxu0 0
  %1744 = vmatprep.subr.bf16.mxu0 0
  %1745 = vmatpush1.bf16.msra.mxu0 0
  %1746 = vmatprep.subr.bf16.mxu0 0
  %1747 = vmatpush1.bf16.msra.mxu0 0
  %1748 = vmatprep.subr.bf16.mxu0 0
  %1749 = vmatpush1.bf16.msra.mxu0 0
  %1750 = vmatprep.subr.bf16.mxu0 0
  %1751 = vmatpush1.bf16.msra.mxu0 0
  %1752 = vmatprep.subr.bf16.mxu0 0
  %1753 = vmatpush1.bf16.msra.mxu0 0
  %1754 = vmatprep.subr.bf16.mxu0 0
  %1755 = vmatpush1.bf16.msra.mxu0 0
  %1756 = vmatprep.subr.bf16.mxu0 0
  %1757 = vmatpush1.bf16.msra.mxu0 0
  %1758 = vmatprep.subr.bf16.mxu0 0
  %1759 = vmatpush1.bf16.msra.mxu0 0
  %1760 = vmatprep.subr.bf16.mxu0 0
  %1761 = vmatpush1.bf16.msra.mxu0 0
  %1762 = vmatprep.subr.bf16.mxu0 0
  %1763 = vmatpush1.bf16.msra.mxu0 0
  %1764 = vmatprep.subr.bf16.mxu0 0
  %1765 = vmatpush1.bf16.msra.mxu0 0
  %1766 = vmatprep.subr.bf16.mxu0 0
  %1767 = vmatpush1.bf16.msra.mxu0 0
  %1768 = vmatprep.subr.bf16.mxu0 0
  %1769 = vmatpush1.bf16.msra.mxu0 0
  %1770 = vmatprep.mubr.bf16.mxu0 0
  %1771 = vmatmul.mubr.bf16.gmra.mrb[0].mxu0 %v1736
  %v1772 = vpop.f32.mrb[0].mxu0
  %v1773 = vadd.f32 %v1135, %v1772
  %v1774 = vpop.f32.mrb[0].mxu0
  %v1775 = vpop.f32.mrb[0].mxu0
  %v1776 = vpop.f32.mrb[0].mxu0
  %1777 = vdwg.mxu0
  %v1778 = vsel %vm1192, %v1773, -inf
  %1779 = vmax.xlane.f32.xlu0 %v1778
  %v1780 = vpop.xlane.xlu0 %1779
  %vm1781 = vcmp.eq.f32.partialorder %v1773, %v1780
  %v1782 = vsel %vm1781, %v1078, 16
  %v1783 = vsel %vm1192, %v1782, 2147483647
  %v1784 = vand.u32 %v1783, 65535
  %v1785 = vshra.s32 %v1783, 16
  %v1786 = vcvt.s32.f32 %v1784
  %v1787 = vcvt.s32.f32 %v1785
  %1788 = vmin.xlane.f32.xlu0 %v1787
  %v1789 = vpop.xlane.xlu0 %1788
  %vm1790 = vcmp.eq.f32.partialorder %v1787, %v1789
  %v1791 = vsel %vm1790, %v1786, inf
  %1792 = vmin.xlane.f32.xlu0 %v1791
  %v1793 = vpop.xlane.xlu0 %1792
  %v1794 = vcvt.f32.s32 %v1793
  %v1795 = vcvt.f32.s32 %v1789
  %v1796 = vshll.u32 %v1795, 16
  %v1797 = vadd.s32 %v1796, %v1794
  %vm1798 = vcmp.eq.s32.totalorder %v1078, %v1797
  %v1799 = vsel %vm1798, 1, 0
  %v1800 = vcvt.s32.f32 %v1799
  %v1801 = vpack.c.bf16 %v1800, %v1800
  %v1803 = vsel %vm1085, %v1801, 0
  %1805 = vmatprep.subr.bf16.mxu0 0
  %1806 = vmatpush1.bf16.msra.mxu0 %v1083
  %1807 = vmatprep.subr.bf16.mxu0 0
  %1808 = vmatpush1.bf16.msra.mxu0 0
  %1809 = vmatprep.subr.bf16.mxu0 0
  %1810 = vmatpush1.bf16.msra.mxu0 0
  %1811 = vmatprep.subr.bf16.mxu0 0
  %1812 = vmatpush1.bf16.msra.mxu0 0
  %1813 = vmatprep.subr.bf16.mxu0 0
  %1814 = vmatpush1.bf16.msra.mxu0 0
  %1815 = vmatprep.subr.bf16.mxu0 0
  %1816 = vmatpush1.bf16.msra.mxu0 0
  %1817 = vmatprep.subr.bf16.mxu0 0
  %1818 = vmatpush1.bf16.msra.mxu0 0
  %1819 = vmatprep.subr.bf16.mxu0 0
  %1820 = vmatpush1.bf16.msra.mxu0 0
  %1821 = vmatprep.subr.bf16.mxu0 0
  %1822 = vmatpush1.bf16.msra.mxu0 0
  %1823 = vmatprep.subr.bf16.mxu0 0
  %1824 = vmatpush1.bf16.msra.mxu0 0
  %1825 = vmatprep.subr.bf16.mxu0 0
  %1826 = vmatpush1.bf16.msra.mxu0 0
  %1827 = vmatprep.subr.bf16.mxu0 0
  %1828 = vmatpush1.bf16.msra.mxu0 0
  %1829 = vmatprep.subr.bf16.mxu0 0
  %1830 = vmatpush1.bf16.msra.mxu0 0
  %1831 = vmatprep.subr.bf16.mxu0 0
  %1832 = vmatpush1.bf16.msra.mxu0 0
  %1833 = vmatprep.subr.bf16.mxu0 0
  %1834 = vmatpush1.bf16.msra.mxu0 0
  %1835 = vmatprep.subr.bf16.mxu0 0
  %1836 = vmatpush1.bf16.msra.mxu0 0
  %1837 = vmatprep.mubr.bf16.mxu0 0
  %1838 = vmatmul.mubr.bf16.gmra.mrb[0].mxu0 %v1803
  %v1839 = vpop.f32.mrb[0].mxu0
  %v1840 = vadd.f32 0.0, %v1839
  %v1841 = vpop.f32.mrb[0].mxu0
  %v1842 = vpop.f32.mrb[0].mxu0
  %v1843 = vpop.f32.mrb[0].mxu0
  %1844 = vdwg.mxu0
  %v1846 = vrot.slane %v1840, 4
  %v1848 = vadd.f32 %v1067, %v1846
  %v1849 = vtanh.pop %v1848
  %v1850 = vpack.c.bf16 %v1849, %v1849
  %v1852 = vrot.slane %v1850, 2
  %v1854 = vsel %vm981, %v1852, 0
  %1856 = vmatprep.subr.bf16.mxu0 0
  %1857 = vmatpush1.bf16.msra.mxu0 %v1145
  %1858 = vmatprep.subr.bf16.mxu0 0
  %1859 = vmatpush1.bf16.msra.mxu0 %v1146
  %1860 = vmatprep.subr.bf16.mxu0 0
  %1861 = vmatpush1.bf16.msra.mxu0 0
  %1862 = vmatprep.subr.bf16.mxu0 0
  %1863 = vmatpush1.bf16.msra.mxu0 0
  %1864 = vmatprep.subr.bf16.mxu0 0
  %1865 = vmatpush1.bf16.msra.mxu0 0
  %1866 = vmatprep.subr.bf16.mxu0 0
  %1867 = vmatpush1.bf16.msra.mxu0 0
  %1868 = vmatprep.subr.bf16.mxu0 0
  %1869 = vmatpush1.bf16.msra.mxu0 0
  %1870 = vmatprep.subr.bf16.mxu0 0
  %1871 = vmatpush1.bf16.msra.mxu0 0
  %1872 = vmatprep.subr.bf16.mxu0 0
  %1873 = vmatpush1.bf16.msra.mxu0 0
  %1874 = vmatprep.subr.bf16.mxu0 0
  %1875 = vmatpush1.bf16.msra.mxu0 0
  %1876 = vmatprep.subr.bf16.mxu0 0
  %1877 = vmatpush1.bf16.msra.mxu0 0
  %1878 = vmatprep.subr.bf16.mxu0 0
  %1879 = vmatpush1.bf16.msra.mxu0 0
  %1880 = vmatprep.subr.bf16.mxu0 0
  %1881 = vmatpush1.bf16.msra.mxu0 0
  %1882 = vmatprep.subr.bf16.mxu0 0
  %1883 = vmatpush1.bf16.msra.mxu0 0
  %1884 = vmatprep.subr.bf16.mxu0 0
  %1885 = vmatpush1.bf16.msra.mxu0 0
  %1886 = vmatprep.subr.bf16.mxu0 0
  %1887 = vmatpush1.bf16.msra.mxu0 0
  %1888 = vmatprep.mubr.bf16.mxu0 0
  %1889 = vmatmul.mubr.bf16.gmra.mrb[0].mxu0 %v1854
  %v1890 = vpop.f32.mrb[0].mxu0
  %v1891 = vadd.f32 %v1135, %v1890
  %v1892 = vpop.f32.mrb[0].mxu0
  %v1893 = vpop.f32.mrb[0].mxu0
  %v1894 = vpop.f32.mrb[0].mxu0
  %1895 = vdwg.mxu0
  %v1896 = vsel %vm1192, %v1891, -inf
  %1897 = vmax.xlane.f32.xlu0 %v1896
  %v1898 = vpop.xlane.xlu0 %1897
  %vm1899 = vcmp.eq.f32.partialorder %v1891, %v1898
  %v1900 = vsel %vm1899, %v1078, 16
  %v1901 = vsel %vm1192, %v1900, 2147483647
  %v1902 = vand.u32 %v1901, 65535
  %v1903 = vshra.s32 %v1901, 16
  %v1904 = vcvt.s32.f32 %v1902
  %v1905 = vcvt.s32.f32 %v1903
  %1906 = vmin.xlane.f32.xlu0 %v1905
  %v1907 = vpop.xlane.xlu0 %1906
  %vm1908 = vcmp.eq.f32.partialorder %v1905, %v1907
  %v1909 = vsel %vm1908, %v1904, inf
  %1910 = vmin.xlane.f32.xlu0 %v1909
  %v1911 = vpop.xlane.xlu0 %1910
  %v1912 = vcvt.f32.s32 %v1911
  %v1913 = vcvt.f32.s32 %v1907
  %v1914 = vshll.u32 %v1913, 16
  %v1915 = vadd.s32 %v1914, %v1912
  %vm1916 = vcmp.eq.s32.totalorder %v1078, %v1915
  %v1917 = vsel %vm1916, 1, 0
  %v1918 = vcvt.s32.f32 %v1917
  %v1919 = vpack.c.bf16 %v1918, %v1918
  %v1921 = vsel %vm1085, %v1919, 0
  %1923 = vmatprep.subr.bf16.mxu0 0
  %1924 = vmatpush1.bf16.msra.mxu0 %v1083
  %1925 = vmatprep.subr.bf16.mxu0 0
  %1926 = vmatpush1.bf16.msra.mxu0 0
  %1927 = vmatprep.subr.bf16.mxu0 0
  %1928 = vmatpush1.bf16.msra.mxu0 0
  %1929 = vmatprep.subr.bf16.mxu0 0
  %1930 = vmatpush1.bf16.msra.mxu0 0
  %1931 = vmatprep.subr.bf16.mxu0 0
  %1932 = vmatpush1.bf16.msra.mxu0 0
  %1933 = vmatprep.subr.bf16.mxu0 0
  %1934 = vmatpush1.bf16.msra.mxu0 0
  %1935 = vmatprep.subr.bf16.mxu0 0
  %1936 = vmatpush1.bf16.msra.mxu0 0
  %1937 = vmatprep.subr.bf16.mxu0 0
  %1938 = vmatpush1.bf16.msra.mxu0 0
  %1939 = vmatprep.subr.bf16.mxu0 0
  %1940 = vmatpush1.bf16.msra.mxu0 0
  %1941 = vmatprep.subr.bf16.mxu0 0
  %1942 = vmatpush1.bf16.msra.mxu0 0
  %1943 = vmatprep.subr.bf16.mxu0 0
  %1944 = vmatpush1.bf16.msra.mxu0 0
  %1945 = vmatprep.subr.bf16.mxu0 0
  %1946 = vmatpush1.bf16.msra.mxu0 0
  %1947 = vmatprep.subr.bf16.mxu0 0
  %1948 = vmatpush1.bf16.msra.mxu0 0
  %1949 = vmatprep.subr.bf16.mxu0 0
  %1950 = vmatpush1.bf16.msra.mxu0 0
  %1951 = vmatprep.subr.bf16.mxu0 0
  %1952 = vmatpush1.bf16.msra.mxu0 0
  %1953 = vmatprep.subr.bf16.mxu0 0
  %1954 = vmatpush1.bf16.msra.mxu0 0
  %1955 = vmatprep.mubr.bf16.mxu0 0
  %1956 = vmatmul.mubr.bf16.gmra.mrb[0].mxu0 %v1921
  %v1957 = vpop.f32.mrb[0].mxu0
  %v1958 = vadd.f32 0.0, %v1957
  %v1959 = vpop.f32.mrb[0].mxu0
  %v1960 = vpop.f32.mrb[0].mxu0
  %v1961 = vpop.f32.mrb[0].mxu0
  %1962 = vdwg.mxu0
  %v1964 = vrot.slane %v1958, 2
  %v1966 = vadd.f32 %v1067, %v1964
  %v1967 = vtanh.pop %v1966
  %v1968 = vpack.c.bf16 %v1967, %v1967
  %v1970 = vrot.slane %v1968, 3
  %v1972 = vsel %vm981, %v1970, 0
  %1974 = vmatprep.subr.bf16.mxu0 0
  %1975 = vmatpush1.bf16.msra.mxu0 %v1145
  %1976 = vmatprep.subr.bf16.mxu0 0
  %1977 = vmatpush1.bf16.msra.mxu0 %v1146
  %1978 = vmatprep.subr.bf16.mxu0 0
  %1979 = vmatpush1.bf16.msra.mxu0 0
  %1980 = vmatprep.subr.bf16.mxu0 0
  %1981 = vmatpush1.bf16.msra.mxu0 0
  %1982 = vmatprep.subr.bf16.mxu0 0
  %1983 = vmatpush1.bf16.msra.mxu0 0
  %1984 = vmatprep.subr.bf16.mxu0 0
  %1985 = vmatpush1.bf16.msra.mxu0 0
  %1986 = vmatprep.subr.bf16.mxu0 0
  %1987 = vmatpush1.bf16.msra.mxu0 0
  %1988 = vmatprep.subr.bf16.mxu0 0
  %1989 = vmatpush1.bf16.msra.mxu0 0
  %1990 = vmatprep.subr.bf16.mxu0 0
  %1991 = vmatpush1.bf16.msra.mxu0 0
  %1992 = vmatprep.subr.bf16.mxu0 0
  %1993 = vmatpush1.bf16.msra.mxu0 0
  %1994 = vmatprep.subr.bf16.mxu0 0
  %1995 = vmatpush1.bf16.msra.mxu0 0
  %1996 = vmatprep.subr.bf16.mxu0 0
  %1997 = vmatpush1.bf16.msra.mxu0 0
  %1998 = vmatprep.subr.bf16.mxu0 0
  %1999 = vmatpush1.bf16.msra.mxu0 0
  %2000 = vmatprep.subr.bf16.mxu0 0
  %2001 = vmatpush1.bf16.msra.mxu0 0
  %2002 = vmatprep.subr.bf16.mxu0 0
  %2003 = vmatpush1.bf16.msra.mxu0 0
  %2004 = vmatprep.subr.bf16.mxu0 0
  %2005 = vmatpush1.bf16.msra.mxu0 0
  %2006 = vmatprep.mubr.bf16.mxu0 0
  %2007 = vmatmul.mubr.bf16.gmra.mrb[0].mxu0 %v1972
  %v2008 = vpop.f32.mrb[0].mxu0
  %v2009 = vadd.f32 %v1135, %v2008
  %v2010 = vpop.f32.mrb[0].mxu0
  %v2011 = vpop.f32.mrb[0].mxu0
  %v2012 = vpop.f32.mrb[0].mxu0
  %2013 = vdwg.mxu0
  %v2015 = vrot.slane %v1306, 6
  %v2018 = vrot.slane %v1424, 4
  %v2021 = vrot.slane %v1542, 2
  %v2024 = vrot.slane %v1773, 6
  %v2027 = vrot.slane %v1891, 4
  %v2030 = vrot.slane %v2009, 2
  %v2032 = vsel %vm942, %v1187, %v2015
  %v2033 = vsel %vm944, %v2032, %v2018
  %v2034 = vsel %vm946, %v2033, %v2021
  %v2035 = vsel %vm942, %v1655, %v2024
  %v2036 = vsel %vm944, %v2035, %v2027
  %v2037 = vsel %vm946, %v2036, %v2030
  %2038 = vst.msk [vmem:[%s11] sm:$0xff] %vm1085, %v2034
  %2039 = vst.msk [vmem:[%s11 + $0x8] sm:$0xff] %vm1085, %v2037
  // Predicated region
  $region42: #{ac_seg_forward.1} parent=0 // pred_check
    _
  $region43: #{ac_seg_forward.1} parent=0 // pred_check_branch
    %2041 = sbr.rel (0) target = $region45
  $region44: #{ac_seg_forward.1} parent=0 // pred_region
    _
  $region45: #{ac_seg_forward.1} parent=0 // pred_fallthru
    _
  // Predicated region
  $region46: #{ac_seg_forward.1} parent=0 // pred_check
    _
  $region47: #{ac_seg_forward.1} parent=0 // pred_check_branch
    %2043 = sbr.rel (0) target = $region49
  $region48: #{ac_seg_forward.1} parent=0 // pred_region
    _
  $region49: #{ac_seg_forward.1} parent=0 // pred_fallthru
    _
  // Predicated region
  $region50: #{ac_seg_forward.1} parent=0 // pred_check
    _
  $region51: #{ac_seg_forward.1} parent=0 // pred_check_branch
    %2045 = sbr.rel (0) target = $region53
  $region52: #{ac_seg_forward.1} parent=0 // pred_region
    _
  $region53: #{ac_seg_forward.1} parent=0 // pred_fallthru
    _
  // Predicated region
  $region54: #{ac_seg_forward.1} parent=0 // pred_check
    _
  $region55: #{ac_seg_forward.1} parent=0 // pred_check_branch
    %2047 = sbr.rel (0) target = $region57
  $region56: #{ac_seg_forward.1} parent=0 // pred_region
    _
  $region57: #{ac_seg_forward.1} parent=0 // pred_fallthru
    _

</llo_original>
